<compile_context>
chip_gen: v7x
topology: tpu7x:2x2x1
jax: 0.10.0
libtpu: 0.0.40
codegen_flags: <defaults>
</compile_context>

<pallas_src>
import jax
import jax.numpy as jnp
import numpy as np
from jax.experimental import pallas as pl
from jax.experimental.pallas import tpu as pltpu

BN_EPS = 1e-5


# --------------------------------------------------------------------------------------
# Pallas kernel: one batch tile of the (BN/mask-folded, zero-padded) MLP.
# --------------------------------------------------------------------------------------
def fnn_mlp_kernel(xv_ref, w1_ref, b1_ref, w2_ref, b2_ref, wo_ref, bo_ref, out_ref):
    x = xv_ref[...]                                  # (TB, Ep) bf16, masked fields pruned

    # layer 1: Linear (+folded eval-BN) -> ReLU
    # TODO(synk): Dropout is eval-mode identity; training-mode dropout not implemented.
    h = jnp.dot(x, w1_ref[...], preferred_element_type=jnp.float32) + b1_ref[...]
    h = jnp.maximum(h, 0.0)

    # layer 2: Linear (+folded eval-BN) -> ReLU  (f32 epilogue; only matmul operands bf16)
    h = jnp.dot(h.astype(w2_ref.dtype), w2_ref[...],
                preferred_element_type=jnp.float32) + b2_ref[...]
    h = jnp.maximum(h, 0.0)

    # head: (1, H2) . (TB, H2)^T -> lane-dense (1, TB) row of scores.
    # NOTE(v6e): contracting h's lane dim may insert an XLU transpose per tile; accepted
    # while the kernel is bound on the xv HBM stream.
    y = jax.lax.dot_general(wo_ref[...], h.astype(wo_ref.dtype),
                            dimension_numbers=(((1,), (1,)), ((), ())),
                            preferred_element_type=jnp.float32)
    out_ref[...] = y + bo_ref[...]                   # bo is (1, 1), broadcast over lanes


# --------------------------------------------------------------------------------------
# Parameter construction (matches the PyTorch module's init).
# --------------------------------------------------------------------------------------
def init_params(key, field_dim, latent_dim, mlp_dims, arch_raw):
    feature_num = int(sum(field_dim))
    field_num = len(field_dim)
    embed_output_dim = field_num * latent_dim

    ks = jax.random.split(key, 4)

    # Xavier-uniform embedding (torch.nn.init.xavier_uniform_)
    bound_e = (6.0 / (feature_num + latent_dim)) ** 0.5
    embedding = jax.random.uniform(ks[0], (feature_num, latent_dim),
                                   jnp.float32, -bound_e, bound_e)

    # arch discretization: 1 where arch > 0 else 0
    arch = jnp.where(jnp.asarray(arch_raw) > 0, 1.0, 0.0).astype(jnp.float32)

    def linear(k, fan_in, fan_out):
        kw, kb = jax.random.split(k)
        bound = 1.0 / (fan_in ** 0.5)
        w = jax.random.uniform(kw, (fan_in, fan_out), jnp.float32, -bound, bound)
        b = jax.random.uniform(kb, (1, fan_out), jnp.float32, -bound, bound)
        return w, b

    h1, h2 = mlp_dims
    w1, b1 = linear(ks[1], embed_output_dim, h1)
    w2, b2 = linear(ks[2], h1, h2)
    wo, bo = linear(ks[3], h2, 1)

    def bn(h):
        # PyTorch BatchNorm1d defaults: gamma=1, beta=0, running_mean=0, running_var=1
        return (jnp.ones((1, h), jnp.float32), jnp.zeros((1, h), jnp.float32),
                jnp.zeros((1, h), jnp.float32), jnp.ones((1, h), jnp.float32))

    g1, be1, rm1, rv1 = bn(h1)
    g2, be2, rm2, rv2 = bn(h2)

    return dict(embedding=embedding, arch=arch,
                w1=w1, b1=b1, g1=g1, be1=be1, rm1=rm1, rv1=rv1,
                w2=w2, b2=b2, g2=g2, be2=be2, rm2=rm2, rv2=rv2,
                wo=wo, bo=bo)


# --------------------------------------------------------------------------------------
# One-time folding: arch mask pruning + eval-mode BN folding + padding + bf16 casts.
# --------------------------------------------------------------------------------------
def _round_up(v, m):
    return ((v + m - 1) // m) * m


def fold_params(params, latent_dim, compute_dtype=jnp.bfloat16):
    D = latent_dim
    arch = np.asarray(jax.device_get(params['arch']))          # concrete {0,1} per field
    kept = np.nonzero(arch > 0)[0]
    pruned_ok = kept.size > 0
    if not pruned_ok:
        # Degenerate all-masked arch: keep a single zero-weight field so the kernel path
        # is unchanged (score becomes an input-independent constant, as in the module).
        kept = np.array([0], dtype=np.int64)

    F_kept = int(kept.size)
    E = F_kept * D
    H1 = params['w1'].shape[1]
    H2 = params['w2'].shape[1]

    # Dense-layout padding: hidden dims -> 128 lanes, contracted E -> multiple of 16
    # (bf16 sublane packing). Padded units get zero weight/bias -> ReLU(0) -> contribute 0.
    H1p, H2p = _round_up(H1, 128), _round_up(H2, 128)
    Ep = _round_up(E, 16)

    def bn_scale(g, rv):
        return g * jax.lax.rsqrt(rv + BN_EPS)

    # ---- layer 1: keep only unmasked-field row blocks of w1, fold BN, pad ----
    row_idx = (kept[:, None] * D + np.arange(D)[None, :]).reshape(-1)     # (E,)
    s1 = bn_scale(params['g1'], params['rv1'])
    w1 = params['w1'][jnp.asarray(row_idx)] * s1                          # (E, H1)
    if not pruned_ok:
        w1 = jnp.zeros_like(w1)
    b1 = (params['b1'] - params['rm1']) * s1 + params['be1']              # (1, H1)
    w1 = jnp.zeros((Ep, H1p), jnp.float32).at[:E, :H1].set(w1)
    b1 = jnp.zeros((1, H1p), jnp.float32).at[:, :H1].set(b1)

    # ---- layer 2 ----
    s2 = bn_scale(params['g2'], params['rv2'])
    w2 = params['w2'] * s2
    b2 = (params['b2'] - params['rm2']) * s2 + params['be2']
    w2 = jnp.zeros((H1p, H2p), jnp.float32).at[:H1, :H2].set(w2)
    b2 = jnp.zeros((1, H2p), jnp.float32).at[:, :H2].set(b2)

    # ---- head ----
    wo = jnp.zeros((1, H2p), jnp.float32).at[:, :H2].set(params['wo'].T)
    bo = params['bo'].astype(jnp.float32)

    return dict(
        emb=params['embedding'].astype(compute_dtype),   # bf16 table: gather reads half the bytes
        kept_fields=jnp.asarray(kept, dtype=jnp.int32),
        e_dim=E, e_pad=Ep,
        w1=w1.astype(compute_dtype), b1=b1,
        w2=w2.astype(compute_dtype), b2=b2,
        wo=wo.astype(compute_dtype), bo=bo,
    )


# --------------------------------------------------------------------------------------
# Forward wrapper.
# --------------------------------------------------------------------------------------
def _choose_block_b(B, max_block_b=512):
    """Largest 128-multiple batch tile, capped, keeping >= 2 grid steps when B allows
    so the 'parallel' axis can shard across v7x's two TensorCores."""
    assert max_block_b % 128 == 0
    half = -(-B // 2)                                   # ceil(B / 2)
    tb = _round_up(half, 128)
    return max(128, min(max_block_b, tb))


def _pick_vmem_limit():
    """Per-generation VMEM budget: ~3/4 of physical, never above 64 MiB
    (v7x has 64 MiB/TC vs 128 MiB on v5e/v6e)."""
    try:
        cap = pltpu.get_tpu_info().vmem_capacity_bytes
    except Exception:
        cap = 64 * 1024 * 1024
    return int(min(cap * 3 // 4, 64 * 1024 * 1024))


def _resident_spec(shape, single_buffer):
    """Constant index_map -> block never changes across the grid; single-buffer it to
    halve the resident-weight VMEM footprint (matters on v7x's 64 MiB VMEM)."""
    index_map = lambda i: (0, 0)
    if single_buffer:
        try:
            return pl.BlockSpec(shape, index_map, pipeline_mode=pl.Buffered(1))
        except TypeError:          # jax version without pipeline_mode on BlockSpec
            pass
    return pl.BlockSpec(shape, index_map)


def fnn_retrain_forward(x_idx, folded, block_b=512):
    B = x_idx.shape[0]
    E, Ep = folded['e_dim'], folded['e_pad']

    # Prune arch-masked field columns before the gather (they contribute exactly zero).
    x_kept = jnp.take(x_idx, folded['kept_fields'], axis=1)               # (B, F_kept)

    # Embedding gather (plain JAX glue); the bf16 table halves the gather bytes.
    # TODO(synk): move the gather in-kernel (resident bf16 table + int32 index tiles /
    # scalar prefetch) to eliminate the (B, E) xv HBM round trip when the table fits VMEM.
    xv = jnp.take(folded['emb'], x_kept, axis=0).reshape(B, E)

    tb = _choose_block_b(B, block_b)
    n_tiles = pl.cdiv(B, tb)
    B_pad = n_tiles * tb
    if B_pad != B or Ep != E:
        xv = jnp.pad(xv, ((0, B_pad - B), (0, Ep - E)))

    H1 = folded['w1'].shape[1]
    H2 = folded['w2'].shape[1]

    def call(single_buffer_weights):
        resident = lambda shape: _resident_spec(shape, single_buffer_weights)
        return pl.pallas_call(
            fnn_mlp_kernel,
            out_shape=jax.ShapeDtypeStruct((1, B_pad), jnp.float32),
            grid=(n_tiles,),
            in_specs=[
                pl.BlockSpec((tb, Ep), lambda i: (i, 0)),   # xv tile (double-buffered DMA)
                resident((Ep, H1)),                         # w1 (mask-pruned + BN folded)
                resident((1, H1)),                          # b1
                resident((H1, H2)),                         # w2 (BN folded)
                resident((1, H2)),                          # b2
                resident((1, H2)),                          # wo (as a row)
                resident((1, 1)),                           # bo
            ],
            out_specs=pl.BlockSpec((1, tb), lambda i: (0, i)),   # lane-dense score row
            compiler_params=pltpu.CompilerParams(
                dimension_semantics=("parallel",),
                vmem_limit_bytes=_pick_vmem_limit(),
            ),
        )(xv, folded['w1'], folded['b1'], folded['w2'], folded['b2'],
          folded['wo'], folded['bo'])

    try:
        out = call(True)          # single-buffered resident weights
    except Exception:
        out = call(False)         # fall back to default double-buffering if unsupported
    # NOTE: rows B..B_pad of `out` are padding garbage; always slice before any reduction.
    return out[0, :B]             # score.squeeze(1) -> (B,)


# --------------------------------------------------------------------------------------
# References.
# --------------------------------------------------------------------------------------
def reference_forward_f32(x_idx, params, latent_dim):
    """Original module semantics, all-f32 (eval-mode BN, dropout identity)."""
    emb = params['embedding']
    arch = params['arch']
    B, F = x_idx.shape
    xv = jnp.take(emb, x_idx, axis=0)
    xe = xv * arch[None, :, None]
    h = xe.reshape(B, F * latent_dim)

    def layer(h, w, b, g, be, rm, rv):
        h = h @ w + b
        h = (h - rm) / jnp.sqrt(rv + BN_EPS) * g + be
        return jnp.maximum(h, 0.0)

    h = layer(h, params['w1'], params['b1'], params['g1'], params['be1'],
              params['rm1'], params['rv1'])
    h = layer(h, params['w2'], params['b2'], params['g2'], params['be2'],
              params['rm2'], params['rv2'])
    h = h @ params['wo'] + params['bo']
    return h[:, 0]


def reference_forward_folded(x_idx, folded):
    """Plain-JAX replica of the kernel math (pruned/padded folded params, bf16 operands)."""
    B = x_idx.shape[0]
    E, Ep = folded['e_dim'], folded['e_pad']
    x_kept = jnp.take(x_idx, folded['kept_fields'], axis=1)
    xv = jnp.take(folded['emb'], x_kept, axis=0).reshape(B, E)
    if Ep != E:
        xv = jnp.pad(xv, ((0, 0), (0, Ep - E)))
    h = jnp.dot(xv, folded['w1'], preferred_element_type=jnp.float32) + folded['b1']
    h = jnp.maximum(h, 0.0)
    h = jnp.dot(h.astype(folded['w2'].dtype), folded['w2'],
                preferred_element_type=jnp.float32) + folded['b2']
    h = jnp.maximum(h, 0.0)
    y = jnp.dot(h.astype(folded['wo'].dtype), folded['wo'].T,
                preferred_element_type=jnp.float32) + folded['bo']
    return y[:, 0]


if __name__ == "__main__":
    # Small, deterministic configuration consistent with the module's __init__.
    field_dim = [3, 4, 5, 6]          # -> field_num=4, feature_num=18
    latent_dim = 8
    mlp_dims = (16, 16)               # padded to 128 lanes inside fold_params
    arch_raw = [0.5, -0.2, 1.0, 0.0]  # discretizes to mask [1, 0, 1, 0] -> 2 fields pruned
    batch = 300                       # exercises auto block_b, a 2-step grid and padding

    key = jax.random.PRNGKey(0)
    k_params, k_x = jax.random.split(key)

    params = init_params(k_params, field_dim, latent_dim, mlp_dims, arch_raw)
    folded = fold_params(params, latent_dim)

    feature_num = int(sum(field_dim))
    x = jax.random.randint(k_x, (batch, len(field_dim)), 0, feature_num, dtype=jnp.int32)

    score = fnn_retrain_forward(x, folded, block_b=512)
    score = jax.block_until_ready(score)
    assert score.shape == (batch,)

    # Tight check: kernel vs. plain-JAX replica of the same (folded, bf16) math.
    ref_folded = reference_forward_folded(x, folded)
    assert jnp.allclose(score, ref_folded, atol=2e-3, rtol=2e-3), \
        float(jnp.max(jnp.abs(score - ref_folded)))

    # Loose check: kernel vs. original f32 module semantics (bf16 weights add small drift).
    ref_f32 = reference_forward_f32(x, params, latent_dim)
    assert jnp.allclose(score, ref_f32, atol=1e-1, rtol=1e-1), \
        float(jnp.max(jnp.abs(score - ref_f32)))

    print("KERNEL_OK")
</pallas_src>

<mosaic_0001>
module attributes {stable_mosaic.version = 11 : i64} {
  func.func @fnn_mlp_kernel(%arg0: i32, %arg1: memref<256x16xbf16, #tpu.memory_space<vmem>>, %arg2: memref<16x128xbf16, #tpu.memory_space<vmem>>, %arg3: memref<1x128xf32, #tpu.memory_space<vmem>>, %arg4: memref<128x128xbf16, #tpu.memory_space<vmem>>, %arg5: memref<1x128xf32, #tpu.memory_space<vmem>>, %arg6: memref<1x128xbf16, #tpu.memory_space<vmem>>, %arg7: memref<1x1xf32, #tpu.memory_space<vmem>>, %arg8: memref<1x256xf32, #tpu.memory_space<vmem>>) attributes {dimension_semantics = [#tpu.dimension_semantics<parallel>], iteration_bounds = array<i64: 2>, scalar_prefetch = 0 : i64, scratch_operands = 0 : i64, tpu.core_type = #tpu.core_type<tc>, window_params = [{transform_indices = @transform_0, window_bounds = array<i64: 256, 16>}, {pipeline_mode = #tpu.pipeline_mode<synchronous>, transform_indices = @transform_1, window_bounds = array<i64: 16, 128>}, {pipeline_mode = #tpu.pipeline_mode<synchronous>, transform_indices = @transform_2, window_bounds = array<i64: 1, 128>}, {pipeline_mode = #tpu.pipeline_mode<synchronous>, transform_indices = @transform_3, window_bounds = array<i64: 128, 128>}, {pipeline_mode = #tpu.pipeline_mode<synchronous>, transform_indices = @transform_4, window_bounds = array<i64: 1, 128>}, {pipeline_mode = #tpu.pipeline_mode<synchronous>, transform_indices = @transform_5, window_bounds = array<i64: 1, 128>}, {pipeline_mode = #tpu.pipeline_mode<synchronous>, transform_indices = @transform_6, window_bounds = array<i64: 1, 1>}, {transform_indices = @transform_7, window_bounds = array<i64: 1, 256>}]} {
    %c0 = arith.constant 0 : index
    %c0_0 = arith.constant 0 : index
    %0 = vector.load %arg1[%c0, %c0_0] : memref<256x16xbf16, #tpu.memory_space<vmem>>, vector<256x16xbf16>
    %c0_1 = arith.constant 0 : index
    %c0_2 = arith.constant 0 : index
    %1 = vector.load %arg2[%c0_1, %c0_2] : memref<16x128xbf16, #tpu.memory_space<vmem>>, vector<16x128xbf16>
    %cst = arith.constant dense<0.000000e+00> : vector<256x128xf32>
    %2 = tpu.matmul %0, %1, %cst {dimension_numbers = #tpu.dot_dimension_numbers<[1], [0], [0], [1], [0, 0, 1, 1], [], []>} : vector<256x16xbf16>, vector<16x128xbf16>, vector<256x128xf32> -> vector<256x128xf32>
    %c0_3 = arith.constant 0 : index
    %c0_4 = arith.constant 0 : index
    %3 = vector.load %arg3[%c0_3, %c0_4] : memref<1x128xf32, #tpu.memory_space<vmem>>, vector<1x128xf32>
    %4 = vector.broadcast %3 : vector<1x128xf32> to vector<256x128xf32>
    %5 = arith.addf %2, %4 : vector<256x128xf32>
    %cst_5 = arith.constant 0.000000e+00 : f32
    %6 = vector.broadcast %cst_5 : f32 to vector<256x128xf32>
    %7 = arith.maximumf %5, %6 : vector<256x128xf32>
    %8 = arith.truncf %7 : vector<256x128xf32> to vector<256x128xbf16>
    %c0_6 = arith.constant 0 : index
    %c0_7 = arith.constant 0 : index
    %9 = vector.load %arg4[%c0_6, %c0_7] : memref<128x128xbf16, #tpu.memory_space<vmem>>, vector<128x128xbf16>
    %cst_8 = arith.constant dense<0.000000e+00> : vector<256x128xf32>
    %10 = tpu.matmul %8, %9, %cst_8 {dimension_numbers = #tpu.dot_dimension_numbers<[1], [0], [0], [1], [0, 0, 1, 1], [], []>} : vector<256x128xbf16>, vector<128x128xbf16>, vector<256x128xf32> -> vector<256x128xf32>
    %c0_9 = arith.constant 0 : index
    %c0_10 = arith.constant 0 : index
    %11 = vector.load %arg5[%c0_9, %c0_10] : memref<1x128xf32, #tpu.memory_space<vmem>>, vector<1x128xf32>
    %12 = vector.broadcast %11 : vector<1x128xf32> to vector<256x128xf32>
    %13 = arith.addf %10, %12 : vector<256x128xf32>
    %cst_11 = arith.constant 0.000000e+00 : f32
    %14 = vector.broadcast %cst_11 : f32 to vector<256x128xf32>
    %15 = arith.maximumf %13, %14 : vector<256x128xf32>
    %c0_12 = arith.constant 0 : index
    %c0_13 = arith.constant 0 : index
    %16 = vector.load %arg6[%c0_12, %c0_13] : memref<1x128xbf16, #tpu.memory_space<vmem>>, vector<1x128xbf16>
    %17 = arith.truncf %15 : vector<256x128xf32> to vector<256x128xbf16>
    %cst_14 = arith.constant dense<0.000000e+00> : vector<1x256xf32>
    %18 = tpu.matmul %16, %17, %cst_14 {dimension_numbers = #tpu.dot_dimension_numbers<[1], [1], [0], [0], [0, 0, 1, 0], [], []>} : vector<1x128xbf16>, vector<256x128xbf16>, vector<1x256xf32> -> vector<1x256xf32>
    %c0_15 = arith.constant 0 : index
    %c0_16 = arith.constant 0 : index
    %19 = vector.load %arg7[%c0_15, %c0_16] : memref<1x1xf32, #tpu.memory_space<vmem>>, vector<1x1xf32>
    %20 = vector.broadcast %19 : vector<1x1xf32> to vector<1x256xf32>
    %21 = arith.addf %18, %20 : vector<1x256xf32>
    %c0_17 = arith.constant 0 : index
    %c0_18 = arith.constant 0 : index
    %22 = vector.load %arg8[%c0_17, %c0_18] : memref<1x256xf32, #tpu.memory_space<vmem>>, vector<1x256xf32>
    tpu.vector_store %arg8[%c0_17, %c0_18], %21 {strides = array<i32>} : memref<1x256xf32, #tpu.memory_space<vmem>>, vector<1x256xf32>,
    return
  }
  func.func @transform_0(%arg0: i32) -> (i32, i32) {
    %c0_i32 = arith.constant 0 : i32
    %c0_i32_0 = arith.constant 0 : i32
    return %arg0, %c0_i32 : i32, i32
  }
  func.func @transform_1(%arg0: i32) -> (i32, i32) {
    %c0_i32 = arith.constant 0 : i32
    %c0_i32_0 = arith.constant 0 : i32
    %c0_i32_1 = arith.constant 0 : i32
    return %c0_i32, %c0_i32_0 : i32, i32
  }
  func.func @transform_2(%arg0: i32) -> (i32, i32) {
    %c0_i32 = arith.constant 0 : i32
    %c0_i32_0 = arith.constant 0 : i32
    %c0_i32_1 = arith.constant 0 : i32
    return %c0_i32, %c0_i32_0 : i32, i32
  }
  func.func @transform_3(%arg0: i32) -> (i32, i32) {
    %c0_i32 = arith.constant 0 : i32
    %c0_i32_0 = arith.constant 0 : i32
    %c0_i32_1 = arith.constant 0 : i32
    return %c0_i32, %c0_i32_0 : i32, i32
  }
  func.func @transform_4(%arg0: i32) -> (i32, i32) {
    %c0_i32 = arith.constant 0 : i32
    %c0_i32_0 = arith.constant 0 : i32
    %c0_i32_1 = arith.constant 0 : i32
    return %c0_i32, %c0_i32_0 : i32, i32
  }
  func.func @transform_5(%arg0: i32) -> (i32, i32) {
    %c0_i32 = arith.constant 0 : i32
    %c0_i32_0 = arith.constant 0 : i32
    %c0_i32_1 = arith.constant 0 : i32
    return %c0_i32, %c0_i32_0 : i32, i32
  }
  func.func @transform_6(%arg0: i32) -> (i32, i32) {
    %c0_i32 = arith.constant 0 : i32
    %c0_i32_0 = arith.constant 0 : i32
    %c0_i32_1 = arith.constant 0 : i32
    return %c0_i32, %c0_i32_0 : i32, i32
  }
  func.func @transform_7(%arg0: i32) -> (i32, i32) {
    %c0_i32 = arith.constant 0 : i32
    %c0_i32_0 = arith.constant 0 : i32
    return %c0_i32, %arg0 : i32, i32
  }
}

module attributes {stable_mosaic.version = 11 : i64} {
  func.func @fnn_mlp_kernel(%arg0: i32, %arg1: memref<256x16xbf16, #tpu.memory_space<vmem>>, %arg2: memref<16x128xbf16, #tpu.memory_space<vmem>>, %arg3: memref<1x128xf32, #tpu.memory_space<vmem>>, %arg4: memref<128x128xbf16, #tpu.memory_space<vmem>>, %arg5: memref<1x128xf32, #tpu.memory_space<vmem>>, %arg6: memref<1x128xbf16, #tpu.memory_space<vmem>>, %arg7: memref<1x1xf32, #tpu.memory_space<vmem>>, %arg8: memref<1x256xf32, #tpu.memory_space<vmem>>) attributes {dimension_semantics = [#tpu.dimension_semantics<parallel>], iteration_bounds = array<i64: 2>, scalar_prefetch = 0 : i64, scratch_operands = 0 : i64, tpu.core_type = #tpu.core_type<tc>, window_params = [{transform_indices = @transform_0, window_bounds = array<i64: 256, 16>}, {pipeline_mode = #tpu.pipeline_mode<synchronous>, transform_indices = @transform_1, window_bounds = array<i64: 16, 128>}, {pipeline_mode = #tpu.pipeline_mode<synchronous>, transform_indices = @transform_2, window_bounds = array<i64: 1, 128>}, {pipeline_mode = #tpu.pipeline_mode<synchronous>, transform_indices = @transform_3, window_bounds = array<i64: 128, 128>}, {pipeline_mode = #tpu.pipeline_mode<synchronous>, transform_indices = @transform_4, window_bounds = array<i64: 1, 128>}, {pipeline_mode = #tpu.pipeline_mode<synchronous>, transform_indices = @transform_5, window_bounds = array<i64: 1, 128>}, {pipeline_mode = #tpu.pipeline_mode<synchronous>, transform_indices = @transform_6, window_bounds = array<i64: 1, 1>}, {transform_indices = @transform_7, window_bounds = array<i64: 1, 256>}]} {
    %c0 = arith.constant 0 : index
    %c0_0 = arith.constant 0 : index
    %0 = vector.load %arg1[%c0, %c0_0] : memref<256x16xbf16, #tpu.memory_space<vmem>>, vector<256x16xbf16>
    %c0_1 = arith.constant 0 : index
    %c0_2 = arith.constant 0 : index
    %1 = vector.load %arg2[%c0_1, %c0_2] : memref<16x128xbf16, #tpu.memory_space<vmem>>, vector<16x128xbf16>
    %cst = arith.constant dense<0.000000e+00> : vector<256x128xf32>
    %2 = tpu.matmul %0, %1, %cst {dimension_numbers = #tpu.dot_dimension_numbers<[1], [0], [0], [1], [0, 0, 1, 1], [], []>} : vector<256x16xbf16>, vector<16x128xbf16>, vector<256x128xf32> -> vector<256x128xf32>
    %c0_3 = arith.constant 0 : index
    %c0_4 = arith.constant 0 : index
    %3 = vector.load %arg3[%c0_3, %c0_4] : memref<1x128xf32, #tpu.memory_space<vmem>>, vector<1x128xf32>
    %4 = vector.broadcast %3 : vector<1x128xf32> to vector<256x128xf32>
    %5 = arith.addf %2, %4 : vector<256x128xf32>
    %cst_5 = arith.constant 0.000000e+00 : f32
    %6 = vector.broadcast %cst_5 : f32 to vector<256x128xf32>
    %7 = arith.maximumf %5, %6 : vector<256x128xf32>
    %8 = arith.truncf %7 : vector<256x128xf32> to vector<256x128xbf16>
    %c0_6 = arith.constant 0 : index
    %c0_7 = arith.constant 0 : index
    %9 = vector.load %arg4[%c0_6, %c0_7] : memref<128x128xbf16, #tpu.memory_space<vmem>>, vector<128x128xbf16>
    %cst_8 = arith.constant dense<0.000000e+00> : vector<256x128xf32>
    %10 = tpu.matmul %8, %9, %cst_8 {dimension_numbers = #tpu.dot_dimension_numbers<[1], [0], [0], [1], [0, 0, 1, 1], [], []>} : vector<256x128xbf16>, vector<128x128xbf16>, vector<256x128xf32> -> vector<256x128xf32>
    %c0_9 = arith.constant 0 : index
    %c0_10 = arith.constant 0 : index
    %11 = vector.load %arg5[%c0_9, %c0_10] : memref<1x128xf32, #tpu.memory_space<vmem>>, vector<1x128xf32>
    %12 = vector.broadcast %11 : vector<1x128xf32> to vector<256x128xf32>
    %13 = arith.addf %10, %12 : vector<256x128xf32>
    %cst_11 = arith.constant 0.000000e+00 : f32
    %14 = vector.broadcast %cst_11 : f32 to vector<256x128xf32>
    %15 = arith.maximumf %13, %14 : vector<256x128xf32>
    %c0_12 = arith.constant 0 : index
    %c0_13 = arith.constant 0 : index
    %16 = vector.load %arg6[%c0_12, %c0_13] : memref<1x128xbf16, #tpu.memory_space<vmem>>, vector<1x128xbf16>
    %17 = arith.truncf %15 : vector<256x128xf32> to vector<256x128xbf16>
    %cst_14 = arith.constant dense<0.000000e+00> : vector<1x256xf32>
    %18 = tpu.matmul %16, %17, %cst_14 {dimension_numbers = #tpu.dot_dimension_numbers<[1], [1], [0], [0], [0, 0, 1, 0], [], []>} : vector<1x128xbf16>, vector<256x128xbf16>, vector<1x256xf32> -> vector<1x256xf32>
    %c0_15 = arith.constant 0 : index
    %c0_16 = arith.constant 0 : index
    %19 = vector.load %arg7[%c0_15, %c0_16] : memref<1x1xf32, #tpu.memory_space<vmem>>, vector<1x1xf32>
    %20 = vector.broadcast %19 : vector<1x1xf32> to vector<1x256xf32>
    %21 = arith.addf %18, %20 : vector<1x256xf32>
    %c0_17 = arith.constant 0 : index
    %c0_18 = arith.constant 0 : index
    %22 = vector.load %arg8[%c0_17, %c0_18] : memref<1x256xf32, #tpu.memory_space<vmem>>, vector<1x256xf32>
    tpu.vector_store %arg8[%c0_17, %c0_18], %21 {strides = array<i32>} : memref<1x256xf32, #tpu.memory_space<vmem>>, vector<1x256xf32>,
    return
  }
  func.func @transform_0(%arg0: i32) -> (i32, i32) {
    %c0_i32 = arith.constant 0 : i32
    %c0_i32_0 = arith.constant 0 : i32
    return %arg0, %c0_i32 : i32, i32
  }
  func.func @transform_1(%arg0: i32) -> (i32, i32) {
    %c0_i32 = arith.constant 0 : i32
    %c0_i32_0 = arith.constant 0 : i32
    %c0_i32_1 = arith.constant 0 : i32
    return %c0_i32, %c0_i32_0 : i32, i32
  }
  func.func @transform_2(%arg0: i32) -> (i32, i32) {
    %c0_i32 = arith.constant 0 : i32
    %c0_i32_0 = arith.constant 0 : i32
    %c0_i32_1 = arith.constant 0 : i32
    return %c0_i32, %c0_i32_0 : i32, i32
  }
  func.func @transform_3(%arg0: i32) -> (i32, i32) {
    %c0_i32 = arith.constant 0 : i32
    %c0_i32_0 = arith.constant 0 : i32
    %c0_i32_1 = arith.constant 0 : i32
    return %c0_i32, %c0_i32_0 : i32, i32
  }
  func.func @transform_4(%arg0: i32) -> (i32, i32) {
    %c0_i32 = arith.constant 0 : i32
    %c0_i32_0 = arith.constant 0 : i32
    %c0_i32_1 = arith.constant 0 : i32
    return %c0_i32, %c0_i32_0 : i32, i32
  }
  func.func @transform_5(%arg0: i32) -> (i32, i32) {
    %c0_i32 = arith.constant 0 : i32
    %c0_i32_0 = arith.constant 0 : i32
    %c0_i32_1 = arith.constant 0 : i32
    return %c0_i32, %c0_i32_0 : i32, i32
  }
  func.func @transform_6(%arg0: i32) -> (i32, i32) {
    %c0_i32 = arith.constant 0 : i32
    %c0_i32_0 = arith.constant 0 : i32
    %c0_i32_1 = arith.constant 0 : i32
    return %c0_i32, %c0_i32_0 : i32, i32
  }
  func.func @transform_7(%arg0: i32) -> (i32, i32) {
    %c0_i32 = arith.constant 0 : i32
    %c0_i32_0 = arith.constant 0 : i32
    return %c0_i32, %arg0 : i32, i32
  }
}

</mosaic_0001>

<llo_original>
// kernel: tpu_custom_call.1
$region0: #{tpu_custom_call.1}
  #allocation0 [shape = 'u32[]', space=smem, size = 0x4, offset = 0x4, fixed_abs, tag = 'smem constant byte address 0x4 - core index']
  #allocation1 [shape = 'u32[144,128]{1,0:T(1,128)}', space=vmem, size = 0x12000, scoped, tag = 'internal scratch']
  #allocation2 [shape = 'f32[1,1]{1,0:T(1,128)S(1)}', space=vmem, size = 0x200, scoped, tag = 'scoped memory for tpu_custom_call.1']
  %s0 = inlined_call_operand.vmem [shape: bf16[512,16], index: 0, kind: input, shape index: {}]
  %s1 = inlined_call_operand.vmem [shape: bf16[16,128], index: 1, kind: input, shape index: {}]
  %s2 = inlined_call_operand.vmem [shape: f32[1,128], index: 2, kind: input, shape index: {}]
  %s3 = inlined_call_operand.vmem [shape: bf16[128,128], index: 3, kind: input, shape index: {}]
  %s4 = inlined_call_operand.vmem [shape: f32[1,128], index: 4, kind: input, shape index: {}]
  %s5 = inlined_call_operand.vmem [shape: bf16[1,128], index: 5, kind: input, shape index: {}]
  %s6 = inlined_call_operand.<no memory space> [shape: f32[1,1], index: 6, kind: input, shape index: {}]
  %s7 = inlined_call_operand.hbm [shape: f32[1,512], index: 7, kind: output, shape index: {}]
  %s8 = sld [smem:[#allocation0]]
  $region61: #{tpu_custom_call.1} parent=0
    _
  %s10 = ssub.s32 1, %s8
  %s11 = scalar_select 0, %s10, %s8
  %v12 = vstv %s6
  %13 = vst [vmem:[#allocation2] sm:$0x1] %v12
  $region1: #{tpu_custom_call.1} parent=0
    #allocation3 [shape = 'u8[2048]{0}', space=vmem, size = 0x800, scoped, tag = 'output window, operand 0']
    #allocation4 [shape = 's32[2]{0}', space=sflag, size = 0x8, scoped, tag = 'scoped memory for tpu_custom_call.1']
    %14 = vsyncpa [#allocation4], 0
    %s15 = scalar_lea.sflag [#allocation4], 1
    %16 = vsyncpa %s15, 0
    loop: start=0, step=1, limit=4
    $region2: #{tpu_custom_call.1} parent=1 // loop_pre_header
      _
    $region3: #{tpu_custom_call.1} parent=1 // loop_header
      %s18 = sphi 0, %s22
      %p19 = scmp.ge.s32.totalorder %s18, 4
      %s28 = sphi 0, %s30
      %s31 = sphi 0, %s28
      %s32 = sphi 0, %s31
      %s48 = sphi 0, %s32
      %s52 = sphi 0, %s52
      %s54 = sphi 0, %s52
      %s55 = sphi 0, %s54
      %s69 = sphi 0, %s55
      %s73 = sphi 0, %s73
      %s75 = sphi 0, %s73
      %s76 = sphi 0, %s75
      %s90 = sphi 0, %s76
      %s94 = sphi 0, %s94
      %s96 = sphi 0, %s94
      %s97 = sphi 0, %s96
      %s111 = sphi 0, %s97
      %s115 = sphi 0, %s115
      %s117 = sphi 0, %s115
      %s118 = sphi 0, %s117
      %s132 = sphi 0, %s118
      %s136 = sphi 0, %s136
      %s138 = sphi 0, %s136
      %s139 = sphi 0, %s138
      %s153 = sphi 0, %s139
      %s157 = sphi 0, %s157
      %s159 = sphi 0, %s157
      %s160 = sphi 0, %s159
      %s174 = sphi 0, %s160
      %s180 = sphi 0, %s182
      %s183 = sphi 0, %s180
      %s184 = sphi 0, %s183
      %s200 = sphi 0, %s184
    $region4: #{tpu_custom_call.1} parent=1 // loop_header_branch
      %21 = sbr.rel (%p19) target = $region8
    $region5: #{tpu_custom_call.1} parent=1 // loop_body
      %s23 = ssub.s32 %s18, 1
      %s24 = ssub.s32 %s18, 2
      %s25 = sadd.s32 %s18, 1
      %s26 = ssub.s32 %s18, %s25
      %p27 = scmp.eq.s32.totalorder %s26, 0
      %s29 = sadd.s32 %s28, 1
      %s30 = scalar_select %p27, %s28, %s29
      %p33 = pneg %p27
      %p34 = scmp.eq.s32.totalorder %s18, 1
      %p35 = por %p33, %p34
      %p36 = scmp.ne.s32.totalorder %s28, %s31
      %p37 = scmp.eq.s32.totalorder %s18, 0
      %p38 = por %p36, %p37
      %p39 = scmp.ne.s32.totalorder %s28, %s31
      %p40 = scmp.eq.s32.totalorder %s23, 1
      %p41 = por %p39, %p40
      %p42 = scmp.ne.s32.totalorder %s31, %s32
      %p43 = scmp.eq.s32.totalorder %s23, 0
      %p44 = por %p42, %p43
      %p45 = scmp.ne.s32.totalorder %s31, %s32
      %p46 = scmp.eq.s32.totalorder %s24, 1
      %p47 = por %p45, %p46
      %p49 = scmp.ne.s32.totalorder %s32, %s48
      %p50 = scmp.eq.s32.totalorder %s24, 0
      %p51 = por %p49, %p50
      %s53 = sadd.s32 %s52, 1
      %p56 = scmp.eq.s32.totalorder %s18, 1
      %p57 = scmp.ne.s32.totalorder %s52, %s54
      %p58 = scmp.eq.s32.totalorder %s18, 0
      %p59 = por %p57, %p58
      %p60 = scmp.ne.s32.totalorder %s52, %s54
      %p61 = scmp.eq.s32.totalorder %s23, 1
      %p62 = por %p60, %p61
      %p63 = scmp.ne.s32.totalorder %s54, %s55
      %p64 = scmp.eq.s32.totalorder %s23, 0
      %p65 = por %p63, %p64
      %p66 = scmp.ne.s32.totalorder %s54, %s55
      %p67 = scmp.eq.s32.totalorder %s24, 1
      %p68 = por %p66, %p67
      %p70 = scmp.ne.s32.totalorder %s55, %s69
      %p71 = scmp.eq.s32.totalorder %s24, 0
      %p72 = por %p70, %p71
      %s74 = sadd.s32 %s73, 1
      %p77 = scmp.eq.s32.totalorder %s18, 1
      %p78 = scmp.ne.s32.totalorder %s73, %s75
      %p79 = scmp.eq.s32.totalorder %s18, 0
      %p80 = por %p78, %p79
      %p81 = scmp.ne.s32.totalorder %s73, %s75
      %p82 = scmp.eq.s32.totalorder %s23, 1
      %p83 = por %p81, %p82
      %p84 = scmp.ne.s32.totalorder %s75, %s76
      %p85 = scmp.eq.s32.totalorder %s23, 0
      %p86 = por %p84, %p85
      %p87 = scmp.ne.s32.totalorder %s75, %s76
      %p88 = scmp.eq.s32.totalorder %s24, 1
      %p89 = por %p87, %p88
      %p91 = scmp.ne.s32.totalorder %s76, %s90
      %p92 = scmp.eq.s32.totalorder %s24, 0
      %p93 = por %p91, %p92
      %s95 = sadd.s32 %s94, 1
      %p98 = scmp.eq.s32.totalorder %s18, 1
      %p99 = scmp.ne.s32.totalorder %s94, %s96
      %p100 = scmp.eq.s32.totalorder %s18, 0
      %p101 = por %p99, %p100
      %p102 = scmp.ne.s32.totalorder %s94, %s96
      %p103 = scmp.eq.s32.totalorder %s23, 1
      %p104 = por %p102, %p103
      %p105 = scmp.ne.s32.totalorder %s96, %s97
      %p106 = scmp.eq.s32.totalorder %s23, 0
      %p107 = por %p105, %p106
      %p108 = scmp.ne.s32.totalorder %s96, %s97
      %p109 = scmp.eq.s32.totalorder %s24, 1
      %p110 = por %p108, %p109
      %p112 = scmp.ne.s32.totalorder %s97, %s111
      %p113 = scmp.eq.s32.totalorder %s24, 0
      %p114 = por %p112, %p113
      %s116 = sadd.s32 %s115, 1
      %p119 = scmp.eq.s32.totalorder %s18, 1
      %p120 = scmp.ne.s32.totalorder %s115, %s117
      %p121 = scmp.eq.s32.totalorder %s18, 0
      %p122 = por %p120, %p121
      %p123 = scmp.ne.s32.totalorder %s115, %s117
      %p124 = scmp.eq.s32.totalorder %s23, 1
      %p125 = por %p123, %p124
      %p126 = scmp.ne.s32.totalorder %s117, %s118
      %p127 = scmp.eq.s32.totalorder %s23, 0
      %p128 = por %p126, %p127
      %p129 = scmp.ne.s32.totalorder %s117, %s118
      %p130 = scmp.eq.s32.totalorder %s24, 1
      %p131 = por %p129, %p130
      %p133 = scmp.ne.s32.totalorder %s118, %s132
      %p134 = scmp.eq.s32.totalorder %s24, 0
      %p135 = por %p133, %p134
      %s137 = sadd.s32 %s136, 1
      %p140 = scmp.eq.s32.totalorder %s18, 1
      %p141 = scmp.ne.s32.totalorder %s136, %s138
      %p142 = scmp.eq.s32.totalorder %s18, 0
      %p143 = por %p141, %p142
      %p144 = scmp.ne.s32.totalorder %s136, %s138
      %p145 = scmp.eq.s32.totalorder %s23, 1
      %p146 = por %p144, %p145
      %p147 = scmp.ne.s32.totalorder %s138, %s139
      %p148 = scmp.eq.s32.totalorder %s23, 0
      %p149 = por %p147, %p148
      %p150 = scmp.ne.s32.totalorder %s138, %s139
      %p151 = scmp.eq.s32.totalorder %s24, 1
      %p152 = por %p150, %p151
      %p154 = scmp.ne.s32.totalorder %s139, %s153
      %p155 = scmp.eq.s32.totalorder %s24, 0
      %p156 = por %p154, %p155
      %s158 = sadd.s32 %s157, 1
      %p161 = scmp.eq.s32.totalorder %s18, 1
      %p162 = scmp.ne.s32.totalorder %s157, %s159
      %p163 = scmp.eq.s32.totalorder %s18, 0
      %p164 = por %p162, %p163
      %p165 = scmp.ne.s32.totalorder %s157, %s159
      %p166 = scmp.eq.s32.totalorder %s23, 1
      %p167 = por %p165, %p166
      %p168 = scmp.ne.s32.totalorder %s159, %s160
      %p169 = scmp.eq.s32.totalorder %s23, 0
      %p170 = por %p168, %p169
      %p171 = scmp.ne.s32.totalorder %s159, %s160
      %p172 = scmp.eq.s32.totalorder %s24, 1
      %p173 = por %p171, %p172
      %p175 = scmp.ne.s32.totalorder %s160, %s174
      %p176 = scmp.eq.s32.totalorder %s24, 0
      %p177 = por %p175, %p176
      %s178 = ssub.s32 %s18, %s25
      %p179 = scmp.eq.s32.totalorder %s178, 0
      %s181 = sadd.s32 %s180, 1
      %s182 = scalar_select %p179, %s180, %s181
      %p185 = pneg %p179
      %p186 = scmp.eq.s32.totalorder %s18, 1
      %p187 = por %p185, %p186
      %p188 = scmp.ne.s32.totalorder %s180, %s183
      %p189 = scmp.eq.s32.totalorder %s18, 0
      %p190 = por %p188, %p189
      %p191 = scmp.ne.s32.totalorder %s180, %s183
      %p192 = scmp.eq.s32.totalorder %s23, 1
      %p193 = por %p191, %p192
      %p194 = scmp.ne.s32.totalorder %s183, %s184
      %p195 = scmp.eq.s32.totalorder %s23, 0
      %p196 = por %p194, %p195
      %p197 = scmp.ne.s32.totalorder %s183, %s184
      %p198 = scmp.eq.s32.totalorder %s24, 1
      %p199 = por %p197, %p198
      %p201 = scmp.ne.s32.totalorder %s184, %s200
      %p202 = scmp.eq.s32.totalorder %s24, 0
      %p203 = por %p201, %p202
      %p204 = scmp.le.s32.totalorder 1, %s18
      %p205 = scmp.lt.s32.totalorder %s18, 3
      %p206 = pnand %p204, %p205
      %p207 = pneg %p206
      // Predicated region
      $region9: #{tpu_custom_call.1} parent=5 // pred_check
        _
      $region10: #{tpu_custom_call.1} parent=5 // pred_check_branch
        %209 = sbr.rel (%p206) target = $region12
      $region11: #{tpu_custom_call.1} parent=5 // pred_region
        %s210 = ssub.s32 %s18, 1
        // Predicated region
        $region13: #{tpu_custom_call.1} parent=11 // pred_check
          %p211 = pneg %p65
        $region14: #{tpu_custom_call.1} parent=11 // pred_check_branch
          %213 = sbr.rel (%p211) target = $region16
        $region15: #{tpu_custom_call.1} parent=11 // pred_region
          _
        $region16: #{tpu_custom_call.1} parent=11 // pred_fallthru
          _
        // Predicated region
        $region17: #{tpu_custom_call.1} parent=11 // pred_check
          %p214 = pneg %p86
        $region18: #{tpu_custom_call.1} parent=11 // pred_check_branch
          %216 = sbr.rel (%p214) target = $region20
        $region19: #{tpu_custom_call.1} parent=11 // pred_region
          _
        $region20: #{tpu_custom_call.1} parent=11 // pred_fallthru
          _
        // Predicated region
        $region21: #{tpu_custom_call.1} parent=11 // pred_check
          %p217 = pneg %p107
        $region22: #{tpu_custom_call.1} parent=11 // pred_check_branch
          %219 = sbr.rel (%p217) target = $region24
        $region23: #{tpu_custom_call.1} parent=11 // pred_region
          _
        $region24: #{tpu_custom_call.1} parent=11 // pred_fallthru
          _
        // Predicated region
        $region25: #{tpu_custom_call.1} parent=11 // pred_check
          %p220 = pneg %p128
        $region26: #{tpu_custom_call.1} parent=11 // pred_check_branch
          %222 = sbr.rel (%p220) target = $region28
        $region27: #{tpu_custom_call.1} parent=11 // pred_region
          _
        $region28: #{tpu_custom_call.1} parent=11 // pred_fallthru
          _
        // Predicated region
        $region29: #{tpu_custom_call.1} parent=11 // pred_check
          %p223 = pneg %p149
        $region30: #{tpu_custom_call.1} parent=11 // pred_check_branch
          %225 = sbr.rel (%p223) target = $region32
        $region31: #{tpu_custom_call.1} parent=11 // pred_region
          _
        $region32: #{tpu_custom_call.1} parent=11 // pred_fallthru
          _
        // Predicated region
        $region33: #{tpu_custom_call.1} parent=11 // pred_check
          %p226 = pneg %p170
        $region34: #{tpu_custom_call.1} parent=11 // pred_check_branch
          %228 = sbr.rel (%p226) target = $region36
        $region35: #{tpu_custom_call.1} parent=11 // pred_region
          _
        $region36: #{tpu_custom_call.1} parent=11 // pred_fallthru
          _
      $region12: #{tpu_custom_call.1} parent=5 // pred_fallthru
        _
      %p229 = scmp.lt.s32.totalorder %s18, 2
      // Predicated region
      $region37: #{tpu_custom_call.1} parent=5 // pred_check
        %p230 = pneg %p229
      $region38: #{tpu_custom_call.1} parent=5 // pred_check_branch
        %232 = sbr.rel (%p230) target = $region40
      $region39: #{tpu_custom_call.1} parent=5 // pred_region
        // Predicated region
        $region41: #{tpu_custom_call.1} parent=39 // pred_check
          %p233 = pneg %p38
        $region42: #{tpu_custom_call.1} parent=39 // pred_check_branch
          %235 = sbr.rel (%p233) target = $region44
        $region43: #{tpu_custom_call.1} parent=39 // pred_region
          %s236 = smul.u32 32, %s18
          %p237 = scmp.lt.s32.totalorder %s236, 63
          %s238 = scalar_select %p237, %s236, 63
          %s239 = smul.addr %s238, 4
          %s240 = scalar_lea.vmem %s0, %s239
          %s241 = smul.u32 32, %s18
        $region44: #{tpu_custom_call.1} parent=39 // pred_fallthru
          _
      $region40: #{tpu_custom_call.1} parent=5 // pred_fallthru
        _
      %p242 = scmp.le.s32.totalorder 1, %s18
      %p243 = scmp.lt.s32.totalorder %s18, 3
      %p244 = pnand %p242, %p243
      %p245 = pneg %p244
      // Predicated region
      $region45: #{tpu_custom_call.1} parent=5 // pred_check
        _
      $region46: #{tpu_custom_call.1} parent=5 // pred_check_branch
        %247 = sbr.rel (%p244) target = $region48
      $region47: #{tpu_custom_call.1} parent=5 // pred_region
        %s248 = ssub.s32 %s18, 1
        %s249 = smul.u32 32, %s23
        %p250 = scmp.lt.s32.totalorder %s249, 63
        %s251 = scalar_select %p250, %s249, 63
        %s252 = smul.addr %s251, 4
        %s253 = scalar_lea.vmem %s0, %s252
        %p254 = pneg %p44
        %p255 = pneg %p41
        %p256 = pneg %p65
        %p257 = pneg %p62
        %p258 = pneg %p86
        %p259 = pneg %p83
        %p260 = pneg %p107
        %p261 = pneg %p104
        %p262 = pneg %p128
        %p263 = pneg %p125
        %p264 = pneg %p149
        %p265 = pneg %p146
        %p266 = pneg %p170
        %p267 = pneg %p167
        %p268 = pneg %p196
        %p269 = pneg %p193
        %s270 = sand.u32 %s183, 1
        %s271 = scalar_lea.sflag [#allocation4], %s270
        %s272 = sand.u32 %s183, 1
        %s273 = smul.addr %s272, 2
        %s274 = scalar_lea.vmem [#allocation3], %s273
        %s275 = smul.u32 32, %s23
        %p276 = scmp.lt.s32.totalorder %s275, 63
        %s277 = scalar_select %p276, %s275, 63
        %s278 = smul.addr %s277, 4
        %s279 = scalar_lea.vmem %s0, %s278
        %s280 = smul.u32 32, %s23
        %s281 = smul.u32 2, %s23
        %v283 = vld [vmem:[%s279] sm:$0xf]
        %v284 = vld [vmem:[%s279 + $0x4] sm:$0xf]
        %v285 = vld [vmem:[%s279 + $0x8] sm:$0xf]
        %v286 = vld [vmem:[%s279 + $0xc] sm:$0xf]
        %v287 = vld [vmem:[%s279 + $0x10] sm:$0xf]
        %v288 = vld [vmem:[%s279 + $0x14] sm:$0xf]
        %v289 = vld [vmem:[%s279 + $0x18] sm:$0xf]
        %v290 = vld [vmem:[%s279 + $0x1c] sm:$0xf]
        %v291 = vld [vmem:[%s279 + $0x20] sm:$0xf]
        %v292 = vld [vmem:[%s279 + $0x24] sm:$0xf]
        %v293 = vld [vmem:[%s279 + $0x28] sm:$0xf]
        %v294 = vld [vmem:[%s279 + $0x2c] sm:$0xf]
        %v295 = vld [vmem:[%s279 + $0x30] sm:$0xf]
        %v296 = vld [vmem:[%s279 + $0x34] sm:$0xf]
        %v297 = vld [vmem:[%s279 + $0x38] sm:$0xf]
        %v298 = vld [vmem:[%s279 + $0x3c] sm:$0xf]
        %v299 = vld [vmem:[%s279 + $0x40] sm:$0xf]
        %v300 = vld [vmem:[%s279 + $0x44] sm:$0xf]
        %v301 = vld [vmem:[%s279 + $0x48] sm:$0xf]
        %v302 = vld [vmem:[%s279 + $0x4c] sm:$0xf]
        %v303 = vld [vmem:[%s279 + $0x50] sm:$0xf]
        %v304 = vld [vmem:[%s279 + $0x54] sm:$0xf]
        %v305 = vld [vmem:[%s279 + $0x58] sm:$0xf]
        %v306 = vld [vmem:[%s279 + $0x5c] sm:$0xf]
        %v307 = vld [vmem:[%s279 + $0x60] sm:$0xf]
        %v308 = vld [vmem:[%s279 + $0x64] sm:$0xf]
        %v309 = vld [vmem:[%s279 + $0x68] sm:$0xf]
        %v310 = vld [vmem:[%s279 + $0x6c] sm:$0xf]
        %v311 = vld [vmem:[%s279 + $0x70] sm:$0xf]
        %v312 = vld [vmem:[%s279 + $0x74] sm:$0xf]
        %v313 = vld [vmem:[%s279 + $0x78] sm:$0xf]
        %v314 = vld [vmem:[%s279 + $0x7c] sm:$0xf]
        %v315 = vld [vmem:[%s1] sm:$0xf]
        %v316 = vld [vmem:[%s1 + $0x4] sm:$0xf]
        %v317 = vld [vmem:[%s2] sm:$0x1]
        %v319 = vlaneseq
        %v320 = vshrl.u32 %v319, 7
        %v321 = vsub.s32 0, %v320
        %v322 = vrot.slane %v317, %v321
        %v356 = vunpack.c.l.b16 %v283
        %v357 = vunpack.c.l.b16 %v284
        %v358 = vunpack.c.l.b16 %v285
        %v359 = vunpack.c.l.b16 %v286
        %v360 = vunpack.c.l.b16 %v287
        %v361 = vunpack.c.l.b16 %v288
        %v362 = vunpack.c.l.b16 %v289
        %v363 = vunpack.c.l.b16 %v290
        %v364 = vunpack.c.l.b16 %v291
        %v365 = vunpack.c.l.b16 %v292
        %v366 = vunpack.c.l.b16 %v293
        %v367 = vunpack.c.l.b16 %v294
        %v368 = vunpack.c.l.b16 %v295
        %v369 = vunpack.c.l.b16 %v296
        %v370 = vunpack.c.l.b16 %v297
        %v371 = vunpack.c.l.b16 %v298
        %v372 = vunpack.c.l.b16 %v299
        %v373 = vunpack.c.l.b16 %v300
        %v374 = vunpack.c.l.b16 %v301
        %v375 = vunpack.c.l.b16 %v302
        %v376 = vunpack.c.l.b16 %v303
        %v377 = vunpack.c.l.b16 %v304
        %v378 = vunpack.c.l.b16 %v305
        %v379 = vunpack.c.l.b16 %v306
        %v380 = vunpack.c.l.b16 %v307
        %v381 = vunpack.c.l.b16 %v308
        %v382 = vunpack.c.l.b16 %v309
        %v383 = vunpack.c.l.b16 %v310
        %v384 = vunpack.c.l.b16 %v311
        %v385 = vunpack.c.l.b16 %v312
        %v386 = vunpack.c.l.b16 %v313
        %v387 = vunpack.c.l.b16 %v314
        %v388 = vpack.c.b16 %v357, %v356
        %v389 = vpack.c.b16 %v359, %v358
        %v390 = vpack.c.b16 %v361, %v360
        %v391 = vpack.c.b16 %v363, %v362
        %v392 = vpack.c.b16 %v365, %v364
        %v393 = vpack.c.b16 %v367, %v366
        %v394 = vpack.c.b16 %v369, %v368
        %v395 = vpack.c.b16 %v371, %v370
        %v396 = vpack.c.b16 %v373, %v372
        %v397 = vpack.c.b16 %v375, %v374
        %v398 = vpack.c.b16 %v377, %v376
        %v399 = vpack.c.b16 %v379, %v378
        %v400 = vpack.c.b16 %v381, %v380
        %v401 = vpack.c.b16 %v383, %v382
        %v402 = vpack.c.b16 %v385, %v384
        %v403 = vpack.c.b16 %v387, %v386
        %v406 = vunpack.c.l.b16 %v315
        %v407 = vunpack.c.l.b16 %v316
        %v408 = vpack.c.b16 %v407, %v406
        %vm410 = vcmask 130048
        %v412 = vsel %vm410, %v388, 0
        %v415 = vsel %vm410, %v389, 0
        %v418 = vsel %vm410, %v390, 0
        %v421 = vsel %vm410, %v391, 0
        %v424 = vsel %vm410, %v392, 0
        %v427 = vsel %vm410, %v393, 0
        %v430 = vsel %vm410, %v394, 0
        %v433 = vsel %vm410, %v395, 0
        %v436 = vsel %vm410, %v396, 0
        %v439 = vsel %vm410, %v397, 0
        %v442 = vsel %vm410, %v398, 0
        %v445 = vsel %vm410, %v399, 0
        %v448 = vsel %vm410, %v400, 0
        %v451 = vsel %vm410, %v401, 0
        %v454 = vsel %vm410, %v402, 0
        %v457 = vsel %vm410, %v403, 0
        %459 = vmatprep.subr.bf16.mxu0 0
        %460 = vmatpush1.bf16.msra.mxu0 %v408
        %461 = vmatprep.subr.bf16.mxu0 0
        %462 = vmatpush1.bf16.msra.mxu0 0
        %463 = vmatprep.subr.bf16.mxu0 0
        %464 = vmatpush1.bf16.msra.mxu0 0
        %465 = vmatprep.subr.bf16.mxu0 0
        %466 = vmatpush1.bf16.msra.mxu0 0
        %467 = vmatprep.subr.bf16.mxu0 0
        %468 = vmatpush1.bf16.msra.mxu0 0
        %469 = vmatprep.subr.bf16.mxu0 0
        %470 = vmatpush1.bf16.msra.mxu0 0
        %471 = vmatprep.subr.bf16.mxu0 0
        %472 = vmatpush1.bf16.msra.mxu0 0
        %473 = vmatprep.subr.bf16.mxu0 0
        %474 = vmatpush1.bf16.msra.mxu0 0
        %475 = vmatprep.subr.bf16.mxu0 0
        %476 = vmatpush1.bf16.msra.mxu0 0
        %477 = vmatprep.subr.bf16.mxu0 0
        %478 = vmatpush1.bf16.msra.mxu0 0
        %479 = vmatprep.subr.bf16.mxu0 0
        %480 = vmatpush1.bf16.msra.mxu0 0
        %481 = vmatprep.subr.bf16.mxu0 0
        %482 = vmatpush1.bf16.msra.mxu0 0
        %483 = vmatprep.subr.bf16.mxu0 0
        %484 = vmatpush1.bf16.msra.mxu0 0
        %485 = vmatprep.subr.bf16.mxu0 0
        %486 = vmatpush1.bf16.msra.mxu0 0
        %487 = vmatprep.subr.bf16.mxu0 0
        %488 = vmatpush1.bf16.msra.mxu0 0
        %489 = vmatprep.subr.bf16.mxu0 0
        %490 = vmatpush1.bf16.msra.mxu0 0
        %491 = vmatprep.mubr.bf16.mxu0 0
        %492 = vmatmul.mubr.bf16.gmra.mrb[0].mxu0 %v412
        %v493 = vpop.f32.mrb[0].mxu0
        %v494 = vadd.f32 %v322, %v493
        %v495 = vpop.f32.mrb[0].mxu0
        %v496 = vpop.f32.mrb[0].mxu0
        %v497 = vadd.f32 %v322, %v496
        %v498 = vpop.f32.mrb[0].mxu0
        %499 = vmatprep.mubr.bf16.mxu0 0
        %500 = vmatmul.mubr.bf16.gmra.mrb[0].mxu0 %v415
        %v501 = vpop.f32.mrb[0].mxu0
        %v502 = vadd.f32 %v322, %v501
        %v503 = vpop.f32.mrb[0].mxu0
        %v504 = vpop.f32.mrb[0].mxu0
        %v505 = vadd.f32 %v322, %v504
        %v506 = vpop.f32.mrb[0].mxu0
        %507 = vmatprep.mubr.bf16.mxu0 0
        %508 = vmatmul.mubr.bf16.gmra.mrb[0].mxu0 %v418
        %v509 = vpop.f32.mrb[0].mxu0
        %v510 = vadd.f32 %v322, %v509
        %v511 = vpop.f32.mrb[0].mxu0
        %v512 = vpop.f32.mrb[0].mxu0
        %v513 = vadd.f32 %v322, %v512
        %v514 = vpop.f32.mrb[0].mxu0
        %515 = vmatprep.mubr.bf16.mxu0 0
        %516 = vmatmul.mubr.bf16.gmra.mrb[0].mxu0 %v421
        %v517 = vpop.f32.mrb[0].mxu0
        %v518 = vadd.f32 %v322, %v517
        %v519 = vpop.f32.mrb[0].mxu0
        %v520 = vpop.f32.mrb[0].mxu0
        %v521 = vadd.f32 %v322, %v520
        %v522 = vpop.f32.mrb[0].mxu0
        %523 = vmatprep.mubr.bf16.mxu0 0
        %524 = vmatmul.mubr.bf16.gmra.mrb[0].mxu0 %v424
        %v525 = vpop.f32.mrb[0].mxu0
        %v526 = vadd.f32 %v322, %v525
        %v527 = vpop.f32.mrb[0].mxu0
        %v528 = vpop.f32.mrb[0].mxu0
        %v529 = vadd.f32 %v322, %v528
        %v530 = vpop.f32.mrb[0].mxu0
        %531 = vmatprep.mubr.bf16.mxu0 0
        %532 = vmatmul.mubr.bf16.gmra.mrb[0].mxu0 %v427
        %v533 = vpop.f32.mrb[0].mxu0
        %v534 = vadd.f32 %v322, %v533
        %v535 = vpop.f32.mrb[0].mxu0
        %v536 = vpop.f32.mrb[0].mxu0
        %v537 = vadd.f32 %v322, %v536
        %v538 = vpop.f32.mrb[0].mxu0
        %539 = vmatprep.mubr.bf16.mxu0 0
        %540 = vmatmul.mubr.bf16.gmra.mrb[0].mxu0 %v430
        %v541 = vpop.f32.mrb[0].mxu0
        %v542 = vadd.f32 %v322, %v541
        %v543 = vpop.f32.mrb[0].mxu0
        %v544 = vpop.f32.mrb[0].mxu0
        %v545 = vadd.f32 %v322, %v544
        %v546 = vpop.f32.mrb[0].mxu0
        %547 = vmatprep.mubr.bf16.mxu0 0
        %548 = vmatmul.mubr.bf16.gmra.mrb[0].mxu0 %v433
        %v549 = vpop.f32.mrb[0].mxu0
        %v550 = vadd.f32 %v322, %v549
        %v551 = vpop.f32.mrb[0].mxu0
        %v552 = vpop.f32.mrb[0].mxu0
        %v553 = vadd.f32 %v322, %v552
        %v554 = vpop.f32.mrb[0].mxu0
        %555 = vmatprep.mubr.bf16.mxu0 0
        %556 = vmatmul.mubr.bf16.gmra.mrb[0].mxu0 %v436
        %v557 = vpop.f32.mrb[0].mxu0
        %v558 = vadd.f32 %v322, %v557
        %v559 = vpop.f32.mrb[0].mxu0
        %v560 = vpop.f32.mrb[0].mxu0
        %v561 = vadd.f32 %v322, %v560
        %v562 = vpop.f32.mrb[0].mxu0
        %563 = vmatprep.mubr.bf16.mxu0 0
        %564 = vmatmul.mubr.bf16.gmra.mrb[0].mxu0 %v439
        %v565 = vpop.f32.mrb[0].mxu0
        %v566 = vadd.f32 %v322, %v565
        %v567 = vpop.f32.mrb[0].mxu0
        %v568 = vpop.f32.mrb[0].mxu0
        %v569 = vadd.f32 %v322, %v568
        %v570 = vpop.f32.mrb[0].mxu0
        %571 = vmatprep.mubr.bf16.mxu0 0
        %572 = vmatmul.mubr.bf16.gmra.mrb[0].mxu0 %v442
        %v573 = vpop.f32.mrb[0].mxu0
        %v574 = vadd.f32 %v322, %v573
        %v575 = vpop.f32.mrb[0].mxu0
        %v576 = vpop.f32.mrb[0].mxu0
        %v577 = vadd.f32 %v322, %v576
        %v578 = vpop.f32.mrb[0].mxu0
        %579 = vmatprep.mubr.bf16.mxu0 0
        %580 = vmatmul.mubr.bf16.gmra.mrb[0].mxu0 %v445
        %v581 = vpop.f32.mrb[0].mxu0
        %v582 = vadd.f32 %v322, %v581
        %v583 = vpop.f32.mrb[0].mxu0
        %v584 = vpop.f32.mrb[0].mxu0
        %v585 = vadd.f32 %v322, %v584
        %v586 = vpop.f32.mrb[0].mxu0
        %587 = vmatprep.mubr.bf16.mxu0 0
        %588 = vmatmul.mubr.bf16.gmra.mrb[0].mxu0 %v448
        %v589 = vpop.f32.mrb[0].mxu0
        %v590 = vadd.f32 %v322, %v589
        %v591 = vpop.f32.mrb[0].mxu0
        %v592 = vpop.f32.mrb[0].mxu0
        %v593 = vadd.f32 %v322, %v592
        %v594 = vpop.f32.mrb[0].mxu0
        %595 = vmatprep.mubr.bf16.mxu0 0
        %596 = vmatmul.mubr.bf16.gmra.mrb[0].mxu0 %v451
        %v597 = vpop.f32.mrb[0].mxu0
        %v598 = vadd.f32 %v322, %v597
        %v599 = vpop.f32.mrb[0].mxu0
        %v600 = vpop.f32.mrb[0].mxu0
        %v601 = vadd.f32 %v322, %v600
        %v602 = vpop.f32.mrb[0].mxu0
        %603 = vmatprep.mubr.bf16.mxu0 0
        %604 = vmatmul.mubr.bf16.gmra.mrb[0].mxu0 %v454
        %v605 = vpop.f32.mrb[0].mxu0
        %v606 = vadd.f32 %v322, %v605
        %v607 = vpop.f32.mrb[0].mxu0
        %v608 = vpop.f32.mrb[0].mxu0
        %v609 = vadd.f32 %v322, %v608
        %v610 = vpop.f32.mrb[0].mxu0
        %611 = vmatprep.mubr.bf16.mxu0 0
        %612 = vmatmul.mubr.bf16.gmra.mrb[0].mxu0 %v457
        %v613 = vpop.f32.mrb[0].mxu0
        %v614 = vadd.f32 %v322, %v613
        %v615 = vpop.f32.mrb[0].mxu0
        %v616 = vpop.f32.mrb[0].mxu0
        %v617 = vadd.f32 %v322, %v616
        %v618 = vpop.f32.mrb[0].mxu0
        %619 = vdwg.mxu0
        %v620 = vmax.f32 %v494, 0.0
        %v621 = vmax.f32 %v497, 0.0
        %v622 = vmax.f32 %v502, 0.0
        %v623 = vmax.f32 %v505, 0.0
        %v624 = vmax.f32 %v510, 0.0
        %v625 = vmax.f32 %v513, 0.0
        %v626 = vmax.f32 %v518, 0.0
        %v627 = vmax.f32 %v521, 0.0
        %v628 = vmax.f32 %v526, 0.0
        %v629 = vmax.f32 %v529, 0.0
        %v630 = vmax.f32 %v534, 0.0
        %v631 = vmax.f32 %v537, 0.0
        %v632 = vmax.f32 %v542, 0.0
        %v633 = vmax.f32 %v545, 0.0
        %v634 = vmax.f32 %v550, 0.0
        %v635 = vmax.f32 %v553, 0.0
        %v636 = vmax.f32 %v558, 0.0
        %v637 = vmax.f32 %v561, 0.0
        %v638 = vmax.f32 %v566, 0.0
        %v639 = vmax.f32 %v569, 0.0
        %v640 = vmax.f32 %v574, 0.0
        %v641 = vmax.f32 %v577, 0.0
        %v642 = vmax.f32 %v582, 0.0
        %v643 = vmax.f32 %v585, 0.0
        %v644 = vmax.f32 %v590, 0.0
        %v645 = vmax.f32 %v593, 0.0
        %v646 = vmax.f32 %v598, 0.0
        %v647 = vmax.f32 %v601, 0.0
        %v648 = vmax.f32 %v606, 0.0
        %v649 = vmax.f32 %v609, 0.0
        %v650 = vmax.f32 %v614, 0.0
        %v651 = vmax.f32 %v617, 0.0
        %v652 = vpack.c.bf16 %v621, %v620
        %v653 = vpack.c.bf16 %v623, %v622
        %v654 = vpack.c.bf16 %v625, %v624
        %v655 = vpack.c.bf16 %v627, %v626
        %v656 = vpack.c.bf16 %v629, %v628
        %v657 = vpack.c.bf16 %v631, %v630
        %v658 = vpack.c.bf16 %v633, %v632
        %v659 = vpack.c.bf16 %v635, %v634
        %v660 = vpack.c.bf16 %v637, %v636
        %v661 = vpack.c.bf16 %v639, %v638
        %v662 = vpack.c.bf16 %v641, %v640
        %v663 = vpack.c.bf16 %v643, %v642
        %v664 = vpack.c.bf16 %v645, %v644
        %v665 = vpack.c.bf16 %v647, %v646
        %v666 = vpack.c.bf16 %v649, %v648
        %v667 = vpack.c.bf16 %v651, %v650
        %v668 = vld [vmem:[%s3] sm:$0xf]
        %v669 = vld [vmem:[%s3 + $0x4] sm:$0xf]
        %v670 = vld [vmem:[%s3 + $0x8] sm:$0xf]
        %v671 = vld [vmem:[%s3 + $0xc] sm:$0xf]
        %v672 = vld [vmem:[%s3 + $0x10] sm:$0xf]
        %v673 = vld [vmem:[%s3 + $0x14] sm:$0xf]
        %v674 = vld [vmem:[%s3 + $0x18] sm:$0xf]
        %v675 = vld [vmem:[%s3 + $0x1c] sm:$0xf]
        %v676 = vld [vmem:[%s3 + $0x20] sm:$0xf]
        %v677 = vld [vmem:[%s3 + $0x24] sm:$0xf]
        %v678 = vld [vmem:[%s3 + $0x28] sm:$0xf]
        %v679 = vld [vmem:[%s3 + $0x2c] sm:$0xf]
        %v680 = vld [vmem:[%s3 + $0x30] sm:$0xf]
        %v681 = vld [vmem:[%s3 + $0x34] sm:$0xf]
        %v682 = vld [vmem:[%s3 + $0x38] sm:$0xf]
        %v683 = vld [vmem:[%s3 + $0x3c] sm:$0xf]
        %v684 = vld [vmem:[%s4] sm:$0x1]
        %v686 = vlaneseq
        %v687 = vshrl.u32 %v686, 7
        %v688 = vsub.s32 0, %v687
        %v689 = vrot.slane %v684, %v688
        %v707 = vunpack.c.l.b16 %v668
        %v708 = vunpack.c.l.b16 %v669
        %v709 = vunpack.c.l.b16 %v670
        %v710 = vunpack.c.l.b16 %v671
        %v711 = vunpack.c.l.b16 %v672
        %v712 = vunpack.c.l.b16 %v673
        %v713 = vunpack.c.l.b16 %v674
        %v714 = vunpack.c.l.b16 %v675
        %v715 = vunpack.c.l.b16 %v676
        %v716 = vunpack.c.l.b16 %v677
        %v717 = vunpack.c.l.b16 %v678
        %v718 = vunpack.c.l.b16 %v679
        %v719 = vunpack.c.l.b16 %v680
        %v720 = vunpack.c.l.b16 %v681
        %v721 = vunpack.c.l.b16 %v682
        %v722 = vunpack.c.l.b16 %v683
        %v723 = vpack.c.b16 %v708, %v707
        %v724 = vpack.c.b16 %v710, %v709
        %v725 = vpack.c.b16 %v712, %v711
        %v726 = vpack.c.b16 %v714, %v713
        %v727 = vpack.c.b16 %v716, %v715
        %v728 = vpack.c.b16 %v718, %v717
        %v729 = vpack.c.b16 %v720, %v719
        %v730 = vpack.c.b16 %v722, %v721
        %739 = vmatprep.subr.bf16.mxu0 0
        %740 = vmatpush1.bf16.msra.mxu0 %v723
        %741 = vmatprep.subr.bf16.mxu0 0
        %742 = vmatpush1.bf16.msra.mxu0 %v724
        %743 = vmatprep.subr.bf16.mxu0 0
        %744 = vmatpush1.bf16.msra.mxu0 %v725
        %745 = vmatprep.subr.bf16.mxu0 0
        %746 = vmatpush1.bf16.msra.mxu0 %v726
        %747 = vmatprep.subr.bf16.mxu0 0
        %748 = vmatpush1.bf16.msra.mxu0 %v727
        %749 = vmatprep.subr.bf16.mxu0 0
        %750 = vmatpush1.bf16.msra.mxu0 %v728
        %751 = vmatprep.subr.bf16.mxu0 0
        %752 = vmatpush1.bf16.msra.mxu0 %v729
        %753 = vmatprep.subr.bf16.mxu0 0
        %754 = vmatpush1.bf16.msra.mxu0 %v730
        %755 = vmatprep.subr.bf16.mxu0 0
        %756 = vmatpush1.bf16.msra.mxu0 0
        %757 = vmatprep.subr.bf16.mxu0 0
        %758 = vmatpush1.bf16.msra.mxu0 0
        %759 = vmatprep.subr.bf16.mxu0 0
        %760 = vmatpush1.bf16.msra.mxu0 0
        %761 = vmatprep.subr.bf16.mxu0 0
        %762 = vmatpush1.bf16.msra.mxu0 0
        %763 = vmatprep.subr.bf16.mxu0 0
        %764 = vmatpush1.bf16.msra.mxu0 0
        %765 = vmatprep.subr.bf16.mxu0 0
        %766 = vmatpush1.bf16.msra.mxu0 0
        %767 = vmatprep.subr.bf16.mxu0 0
        %768 = vmatpush1.bf16.msra.mxu0 0
        %769 = vmatprep.subr.bf16.mxu0 0
        %770 = vmatpush1.bf16.msra.mxu0 0
        %771 = vmatprep.mubr.bf16.mxu0 0
        %772 = vmatmul.mubr.bf16.gmra.mrb[0].mxu0 %v652
        %v773 = vpop.f32.mrb[0].mxu0
        %v774 = vadd.f32 %v689, %v773
        %v775 = vpop.f32.mrb[0].mxu0
        %v776 = vpop.f32.mrb[0].mxu0
        %v777 = vadd.f32 %v689, %v776
        %v778 = vpop.f32.mrb[0].mxu0
        %779 = vmatprep.mubr.bf16.mxu0 0
        %780 = vmatmul.mubr.bf16.gmra.mrb[0].mxu0 %v653
        %v781 = vpop.f32.mrb[0].mxu0
        %v782 = vadd.f32 %v689, %v781
        %v783 = vpop.f32.mrb[0].mxu0
        %v784 = vpop.f32.mrb[0].mxu0
        %v785 = vadd.f32 %v689, %v784
        %v786 = vpop.f32.mrb[0].mxu0
        %787 = vmatprep.mubr.bf16.mxu0 0
        %788 = vmatmul.mubr.bf16.gmra.mrb[0].mxu0 %v654
        %v789 = vpop.f32.mrb[0].mxu0
        %v790 = vadd.f32 %v689, %v789
        %v791 = vpop.f32.mrb[0].mxu0
        %v792 = vpop.f32.mrb[0].mxu0
        %v793 = vadd.f32 %v689, %v792
        %v794 = vpop.f32.mrb[0].mxu0
        %795 = vmatprep.mubr.bf16.mxu0 0
        %796 = vmatmul.mubr.bf16.gmra.mrb[0].mxu0 %v655
        %v797 = vpop.f32.mrb[0].mxu0
        %v798 = vadd.f32 %v689, %v797
        %v799 = vpop.f32.mrb[0].mxu0
        %v800 = vpop.f32.mrb[0].mxu0
        %v801 = vadd.f32 %v689, %v800
        %v802 = vpop.f32.mrb[0].mxu0
        %803 = vmatprep.mubr.bf16.mxu0 0
        %804 = vmatmul.mubr.bf16.gmra.mrb[0].mxu0 %v656
        %v805 = vpop.f32.mrb[0].mxu0
        %v806 = vadd.f32 %v689, %v805
        %v807 = vpop.f32.mrb[0].mxu0
        %v808 = vpop.f32.mrb[0].mxu0
        %v809 = vadd.f32 %v689, %v808
        %v810 = vpop.f32.mrb[0].mxu0
        %811 = vmatprep.mubr.bf16.mxu0 0
        %812 = vmatmul.mubr.bf16.gmra.mrb[0].mxu0 %v657
        %v813 = vpop.f32.mrb[0].mxu0
        %v814 = vadd.f32 %v689, %v813
        %v815 = vpop.f32.mrb[0].mxu0
        %v816 = vpop.f32.mrb[0].mxu0
        %v817 = vadd.f32 %v689, %v816
        %v818 = vpop.f32.mrb[0].mxu0
        %819 = vmatprep.mubr.bf16.mxu0 0
        %820 = vmatmul.mubr.bf16.gmra.mrb[0].mxu0 %v658
        %v821 = vpop.f32.mrb[0].mxu0
        %v822 = vadd.f32 %v689, %v821
        %v823 = vpop.f32.mrb[0].mxu0
        %v824 = vpop.f32.mrb[0].mxu0
        %v825 = vadd.f32 %v689, %v824
        %v826 = vpop.f32.mrb[0].mxu0
        %827 = vmatprep.mubr.bf16.mxu0 0
        %828 = vmatmul.mubr.bf16.gmra.mrb[0].mxu0 %v659
        %v829 = vpop.f32.mrb[0].mxu0
        %v830 = vadd.f32 %v689, %v829
        %v831 = vpop.f32.mrb[0].mxu0
        %v832 = vpop.f32.mrb[0].mxu0
        %v833 = vadd.f32 %v689, %v832
        %v834 = vpop.f32.mrb[0].mxu0
        %835 = vmatprep.mubr.bf16.mxu0 0
        %836 = vmatmul.mubr.bf16.gmra.mrb[0].mxu0 %v660
        %v837 = vpop.f32.mrb[0].mxu0
        %v838 = vadd.f32 %v689, %v837
        %v839 = vpop.f32.mrb[0].mxu0
        %v840 = vpop.f32.mrb[0].mxu0
        %v841 = vadd.f32 %v689, %v840
        %v842 = vpop.f32.mrb[0].mxu0
        %843 = vmatprep.mubr.bf16.mxu0 0
        %844 = vmatmul.mubr.bf16.gmra.mrb[0].mxu0 %v661
        %v845 = vpop.f32.mrb[0].mxu0
        %v846 = vadd.f32 %v689, %v845
        %v847 = vpop.f32.mrb[0].mxu0
        %v848 = vpop.f32.mrb[0].mxu0
        %v849 = vadd.f32 %v689, %v848
        %v850 = vpop.f32.mrb[0].mxu0
        %851 = vmatprep.mubr.bf16.mxu0 0
        %852 = vmatmul.mubr.bf16.gmra.mrb[0].mxu0 %v662
        %v853 = vpop.f32.mrb[0].mxu0
        %v854 = vadd.f32 %v689, %v853
        %v855 = vpop.f32.mrb[0].mxu0
        %v856 = vpop.f32.mrb[0].mxu0
        %v857 = vadd.f32 %v689, %v856
        %v858 = vpop.f32.mrb[0].mxu0
        %859 = vmatprep.mubr.bf16.mxu0 0
        %860 = vmatmul.mubr.bf16.gmra.mrb[0].mxu0 %v663
        %v861 = vpop.f32.mrb[0].mxu0
        %v862 = vadd.f32 %v689, %v861
        %v863 = vpop.f32.mrb[0].mxu0
        %v864 = vpop.f32.mrb[0].mxu0
        %v865 = vadd.f32 %v689, %v864
        %v866 = vpop.f32.mrb[0].mxu0
        %867 = vmatprep.mubr.bf16.mxu0 0
        %868 = vmatmul.mubr.bf16.gmra.mrb[0].mxu0 %v664
        %v869 = vpop.f32.mrb[0].mxu0
        %v870 = vadd.f32 %v689, %v869
        %v871 = vpop.f32.mrb[0].mxu0
        %v872 = vpop.f32.mrb[0].mxu0
        %v873 = vadd.f32 %v689, %v872
        %v874 = vpop.f32.mrb[0].mxu0
        %875 = vmatprep.mubr.bf16.mxu0 0
        %876 = vmatmul.mubr.bf16.gmra.mrb[0].mxu0 %v665
        %v877 = vpop.f32.mrb[0].mxu0
        %v878 = vadd.f32 %v689, %v877
        %v879 = vpop.f32.mrb[0].mxu0
        %v880 = vpop.f32.mrb[0].mxu0
        %v881 = vadd.f32 %v689, %v880
        %v882 = vpop.f32.mrb[0].mxu0
        %883 = vmatprep.mubr.bf16.mxu0 0
        %884 = vmatmul.mubr.bf16.gmra.mrb[0].mxu0 %v666
        %v885 = vpop.f32.mrb[0].mxu0
        %v886 = vadd.f32 %v689, %v885
        %v887 = vpop.f32.mrb[0].mxu0
        %v888 = vpop.f32.mrb[0].mxu0
        %v889 = vadd.f32 %v689, %v888
        %v890 = vpop.f32.mrb[0].mxu0
        %891 = vmatprep.mubr.bf16.mxu0 0
        %892 = vmatmul.mubr.bf16.gmra.mrb[0].mxu0 %v667
        %v893 = vpop.f32.mrb[0].mxu0
        %v894 = vadd.f32 %v689, %v893
        %v895 = vpop.f32.mrb[0].mxu0
        %v896 = vpop.f32.mrb[0].mxu0
        %v897 = vadd.f32 %v689, %v896
        %v898 = vpop.f32.mrb[0].mxu0
        %899 = vdwg.mxu0
        %v900 = vmax.f32 %v774, 0.0
        %v901 = vmax.f32 %v777, 0.0
        %v902 = vmax.f32 %v782, 0.0
        %v903 = vmax.f32 %v785, 0.0
        %v904 = vmax.f32 %v790, 0.0
        %v905 = vmax.f32 %v793, 0.0
        %v906 = vmax.f32 %v798, 0.0
        %v907 = vmax.f32 %v801, 0.0
        %v908 = vmax.f32 %v806, 0.0
        %v909 = vmax.f32 %v809, 0.0
        %v910 = vmax.f32 %v814, 0.0
        %v911 = vmax.f32 %v817, 0.0
        %v912 = vmax.f32 %v822, 0.0
        %v913 = vmax.f32 %v825, 0.0
        %v914 = vmax.f32 %v830, 0.0
        %v915 = vmax.f32 %v833, 0.0
        %v916 = vmax.f32 %v838, 0.0
        %v917 = vmax.f32 %v841, 0.0
        %v918 = vmax.f32 %v846, 0.0
        %v919 = vmax.f32 %v849, 0.0
        %v920 = vmax.f32 %v854, 0.0
        %v921 = vmax.f32 %v857, 0.0
        %v922 = vmax.f32 %v862, 0.0
        %v923 = vmax.f32 %v865, 0.0
        %v924 = vmax.f32 %v870, 0.0
        %v925 = vmax.f32 %v873, 0.0
        %v926 = vmax.f32 %v878, 0.0
        %v927 = vmax.f32 %v881, 0.0
        %v928 = vmax.f32 %v886, 0.0
        %v929 = vmax.f32 %v889, 0.0
        %v930 = vmax.f32 %v894, 0.0
        %v931 = vmax.f32 %v897, 0.0
        %v932 = vld [vmem:[%s5] sm:$0x1]
        %v933 = vpack.c.bf16 %v901, %v900
        %v934 = vpack.c.bf16 %v903, %v902
        %v935 = vpack.c.bf16 %v905, %v904
        %v936 = vpack.c.bf16 %v907, %v906
        %v937 = vpack.c.bf16 %v909, %v908
        %v938 = vpack.c.bf16 %v911, %v910
        %v939 = vpack.c.bf16 %v913, %v912
        %v940 = vpack.c.bf16 %v915, %v914
        %v941 = vpack.c.bf16 %v917, %v916
        %v942 = vpack.c.bf16 %v919, %v918
        %v943 = vpack.c.bf16 %v921, %v920
        %v944 = vpack.c.bf16 %v923, %v922
        %v945 = vpack.c.bf16 %v925, %v924
        %v946 = vpack.c.bf16 %v927, %v926
        %v947 = vpack.c.bf16 %v929, %v928
        %v948 = vpack.c.bf16 %v931, %v930
        %v949 = vld [vmem:[#allocation2] sm:$0x1]
        %951 = vset.pattern.permute.xlu0 0
        %952 = vperm.xlu0 %951, %v949
        %v953 = vpop.permute.xlu0 %952
        %v955 = vlaneseq
        %v956 = vshrl.u32 %v955, 7
        %v957 = vsub.s32 0, %v956
        %v958 = vrot.slane %v953, %v957
        %959 = vmatprep.subr.bf16.mxu0 0
        %960 = vmatpush1.bf16.xpose.msra.mxu0 %v933
        %961 = vmatprep.subr.bf16.mxu0 0
        %962 = vmatpush1.bf16.xpose.msra.mxu0 %v934
        %963 = vmatprep.subr.bf16.mxu0 0
        %964 = vmatpush1.bf16.xpose.msra.mxu0 %v935
        %965 = vmatprep.subr.bf16.mxu0 0
        %966 = vmatpush1.bf16.xpose.msra.mxu0 %v936
        %967 = vmatprep.subr.bf16.mxu0 0
        %968 = vmatpush1.bf16.xpose.msra.mxu0 %v937
        %969 = vmatprep.subr.bf16.mxu0 0
        %970 = vmatpush1.bf16.xpose.msra.mxu0 %v938
        %971 = vmatprep.subr.bf16.mxu0 0
        %972 = vmatpush1.bf16.xpose.msra.mxu0 %v939
        %973 = vmatprep.subr.bf16.mxu0 0
        %974 = vmatpush1.bf16.xpose.msra.mxu0 %v940
        %975 = vmatprep.subr.bf16.mxu0 0
        %976 = vmatpush1.bf16.xpose.msra.mxu0 %v941
        %977 = vmatprep.subr.bf16.mxu0 0
        %978 = vmatpush1.bf16.xpose.msra.mxu0 %v942
        %979 = vmatprep.subr.bf16.mxu0 0
        %980 = vmatpush1.bf16.xpose.msra.mxu0 %v943
        %981 = vmatprep.subr.bf16.mxu0 0
        %982 = vmatpush1.bf16.xpose.msra.mxu0 %v944
        %983 = vmatprep.subr.bf16.mxu0 0
        %984 = vmatpush1.bf16.xpose.msra.mxu0 %v945
        %985 = vmatprep.subr.bf16.mxu0 0
        %986 = vmatpush1.bf16.xpose.msra.mxu0 %v946
        %987 = vmatprep.subr.bf16.mxu0 0
        %988 = vmatpush1.bf16.xpose.msra.mxu0 %v947
        %989 = vmatprep.subr.bf16.mxu0 0
        %990 = vmatpush1.bf16.xpose.msra.mxu0 %v948
        %991 = vmatprep.mubr.bf16.mxu0 0
        %992 = vmatmul.mubr.bf16.gmra.mrb[0].mxu0 %v932
        %v993 = vpop.f32.mrb[0].mxu0
        %v994 = vadd.f32 %v958, %v993
        %v995 = vpop.f32.mrb[0].mxu0
        %v996 = vadd.f32 %v958, %v995
        %v997 = vpop.f32.mrb[0].mxu0
        %v998 = vpop.f32.mrb[0].mxu0
        %999 = vdwg.mxu0
        %v1002 = vcombine.low %v994, %v996
        %v1004 = vunpack.c.l.s4 1966171168
        %v1005 = vunpack.c.0.s8 %v1004
        %v1006 = vlaneseq
        %v1007 = vshrl.u32 %v1006, 7
        %v1008 = vsub.s32 %v1005, %v1007
        %v1009 = vrot.slane %v1002, %v1008
        %v1011 = vunpack.c.l.s4 1966171168
        %v1012 = vunpack.c.0.s8 %v1011
        %v1013 = vlaneseq
        %v1014 = vshrl.u32 %v1013, 7
        %v1015 = vsub.s32 %v1012, %v1014
        %v1016 = vrot.slane %v1009, %v1015
        %v1018 = vlaneseq
        %vm1019 = vcmp.ge.s32.totalorder %v1018, 0
        %vm1020 = vcmp.lt.s32.totalorder %v1018, 256
        %vm1021 = vmand %vm1019, %vm1020
        %1022 = vst.msk [vmem:[%s274] sm:$0x3] %vm1021, %v1016
        %s1023 = sand.u32 %s183, 1
        %s1024 = scalar_lea.sflag [#allocation4], %s1023
        %s1025 = sand.u32 %s183, 1
        %s1026 = smul.addr %s1025, 2
        %s1027 = scalar_lea.vmem [#allocation3], %s1026
        // Predicated region
        $region49: #{tpu_custom_call.1} parent=47 // pred_check
          %p1028 = pneg %p193
        $region50: #{tpu_custom_call.1} parent=47 // pred_check_branch
          %1030 = sbr.rel (%p1028) target = $region52
        $region51: #{tpu_custom_call.1} parent=47 // pred_region
          %s1031 = smul.u32 2, %s23
          %s1033 = ssub.s32 32, 32
          %1034 = vsyncadd %s1024, %s1033
          %s1035 = smul.addr %s1031, 16
          %s1036 = scalar_lea.hbm %s7, %s1035
          %s1038 = sshll.u32 %s1027, 4
          %s1039 = int_to_ptr.vmem [resolvable:$true] %s1038
          %1041 = dma.vmem_to_hbm [thread:$0]  %s1039, 32, %s1036, %s1024
        $region52: #{tpu_custom_call.1} parent=47 // pred_fallthru
          _
      $region48: #{tpu_custom_call.1} parent=5 // pred_fallthru
        _
      %p1042 = scmp.le.s32.totalorder 2, %s18
      // Predicated region
      $region53: #{tpu_custom_call.1} parent=5 // pred_check
        %p1043 = pneg %p1042
      $region54: #{tpu_custom_call.1} parent=5 // pred_check_branch
        %1045 = sbr.rel (%p1043) target = $region56
      $region55: #{tpu_custom_call.1} parent=5 // pred_region
        %s1046 = ssub.s32 %s18, 2
        // Predicated region
        $region57: #{tpu_custom_call.1} parent=55 // pred_check
          %p1047 = pneg %p199
        $region58: #{tpu_custom_call.1} parent=55 // pred_check_branch
          %1049 = sbr.rel (%p1047) target = $region60
        $region59: #{tpu_custom_call.1} parent=55 // pred_region
          %s1050 = sand.u32 %s184, 1
          %s1051 = scalar_lea.sflag [#allocation4], %s1050
          %s1052 = sand.u32 %s184, 1
          %s1053 = smul.addr %s1052, 2
          %s1054 = scalar_lea.vmem [#allocation3], %s1053
          %1055 = dma.done %s1051, 32
        $region60: #{tpu_custom_call.1} parent=55 // pred_fallthru
          _
      $region56: #{tpu_custom_call.1} parent=5 // pred_fallthru
        _
    $region6: #{tpu_custom_call.1} parent=1 // loop_footer
      %s22 = sadd.s32 1, %s18
    $region7: #{tpu_custom_call.1} parent=1 // loop_footer_branch
      %17 = sbr.rel target = $region3
    $region8: #{tpu_custom_call.1} parent=1 // loop_exit
      _
    %1056 = vsyncpa [#allocation4], 1
    %s1057 = scalar_lea.sflag [#allocation4], 1
    %1058 = vsyncpa %s1057, 1

// kernel: tpu_custom_call.1
$region0: #{tpu_custom_call.1}
  #allocation0 [shape = 'u32[]', space=smem, size = 0x4, offset = 0x4, fixed_abs, tag = 'smem constant byte address 0x4 - core index']
  #allocation1 [shape = 'u32[144,128]{1,0:T(1,128)}', space=vmem, size = 0x12000, scoped, tag = 'internal scratch']
  #allocation2 [shape = 'f32[1,1]{1,0:T(1,128)S(1)}', space=vmem, size = 0x200, scoped, tag = 'scoped memory for tpu_custom_call.1']
  %s0 = inlined_call_operand.vmem [shape: bf16[512,16], index: 0, kind: input, shape index: {}]
  %s1 = inlined_call_operand.vmem [shape: bf16[16,128], index: 1, kind: input, shape index: {}]
  %s2 = inlined_call_operand.vmem [shape: f32[1,128], index: 2, kind: input, shape index: {}]
  %s3 = inlined_call_operand.vmem [shape: bf16[128,128], index: 3, kind: input, shape index: {}]
  %s4 = inlined_call_operand.vmem [shape: f32[1,128], index: 4, kind: input, shape index: {}]
  %s5 = inlined_call_operand.vmem [shape: bf16[1,128], index: 5, kind: input, shape index: {}]
  %s6 = inlined_call_operand.<no memory space> [shape: f32[1,1], index: 6, kind: input, shape index: {}]
  %s7 = inlined_call_operand.hbm [shape: f32[1,512], index: 7, kind: output, shape index: {}]
  %s8 = sld [smem:[#allocation0]]
  $region61: #{tpu_custom_call.1} parent=0
    _
  %s10 = ssub.s32 1, %s8
  %s11 = scalar_select 0, %s10, %s8
  %v12 = vstv %s6
  %13 = vst [vmem:[#allocation2] sm:$0x1] %v12
  $region1: #{tpu_custom_call.1} parent=0
    #allocation3 [shape = 'u8[2048]{0}', space=vmem, size = 0x800, scoped, tag = 'output window, operand 0']
    #allocation4 [shape = 's32[2]{0}', space=sflag, size = 0x8, scoped, tag = 'scoped memory for tpu_custom_call.1']
    %14 = vsyncpa [#allocation4], 0
    %s15 = scalar_lea.sflag [#allocation4], 1
    %16 = vsyncpa %s15, 0
    loop: start=0, step=1, limit=4
    $region2: #{tpu_custom_call.1} parent=1 // loop_pre_header
      _
    $region3: #{tpu_custom_call.1} parent=1 // loop_header
      %s18 = sphi 0, %s22
      %p19 = scmp.ge.s32.totalorder %s18, 4
      %s28 = sphi 0, %s30
      %s31 = sphi 0, %s28
      %s32 = sphi 0, %s31
      %s48 = sphi 0, %s32
      %s52 = sphi 0, %s52
      %s54 = sphi 0, %s52
      %s55 = sphi 0, %s54
      %s69 = sphi 0, %s55
      %s73 = sphi 0, %s73
      %s75 = sphi 0, %s73
      %s76 = sphi 0, %s75
      %s90 = sphi 0, %s76
      %s94 = sphi 0, %s94
      %s96 = sphi 0, %s94
      %s97 = sphi 0, %s96
      %s111 = sphi 0, %s97
      %s115 = sphi 0, %s115
      %s117 = sphi 0, %s115
      %s118 = sphi 0, %s117
      %s132 = sphi 0, %s118
      %s136 = sphi 0, %s136
      %s138 = sphi 0, %s136
      %s139 = sphi 0, %s138
      %s153 = sphi 0, %s139
      %s157 = sphi 0, %s157
      %s159 = sphi 0, %s157
      %s160 = sphi 0, %s159
      %s174 = sphi 0, %s160
      %s180 = sphi 0, %s182
      %s183 = sphi 0, %s180
      %s184 = sphi 0, %s183
      %s200 = sphi 0, %s184
    $region4: #{tpu_custom_call.1} parent=1 // loop_header_branch
      %21 = sbr.rel (%p19) target = $region8
    $region5: #{tpu_custom_call.1} parent=1 // loop_body
      %s23 = ssub.s32 %s18, 1
      %s24 = ssub.s32 %s18, 2
      %s25 = sadd.s32 %s18, 1
      %s26 = ssub.s32 %s18, %s25
      %p27 = scmp.eq.s32.totalorder %s26, 0
      %s29 = sadd.s32 %s28, 1
      %s30 = scalar_select %p27, %s28, %s29
      %p33 = pneg %p27
      %p34 = scmp.eq.s32.totalorder %s18, 1
      %p35 = por %p33, %p34
      %p36 = scmp.ne.s32.totalorder %s28, %s31
      %p37 = scmp.eq.s32.totalorder %s18, 0
      %p38 = por %p36, %p37
      %p39 = scmp.ne.s32.totalorder %s28, %s31
      %p40 = scmp.eq.s32.totalorder %s23, 1
      %p41 = por %p39, %p40
      %p42 = scmp.ne.s32.totalorder %s31, %s32
      %p43 = scmp.eq.s32.totalorder %s23, 0
      %p44 = por %p42, %p43
      %p45 = scmp.ne.s32.totalorder %s31, %s32
      %p46 = scmp.eq.s32.totalorder %s24, 1
      %p47 = por %p45, %p46
      %p49 = scmp.ne.s32.totalorder %s32, %s48
      %p50 = scmp.eq.s32.totalorder %s24, 0
      %p51 = por %p49, %p50
      %s53 = sadd.s32 %s52, 1
      %p56 = scmp.eq.s32.totalorder %s18, 1
      %p57 = scmp.ne.s32.totalorder %s52, %s54
      %p58 = scmp.eq.s32.totalorder %s18, 0
      %p59 = por %p57, %p58
      %p60 = scmp.ne.s32.totalorder %s52, %s54
      %p61 = scmp.eq.s32.totalorder %s23, 1
      %p62 = por %p60, %p61
      %p63 = scmp.ne.s32.totalorder %s54, %s55
      %p64 = scmp.eq.s32.totalorder %s23, 0
      %p65 = por %p63, %p64
      %p66 = scmp.ne.s32.totalorder %s54, %s55
      %p67 = scmp.eq.s32.totalorder %s24, 1
      %p68 = por %p66, %p67
      %p70 = scmp.ne.s32.totalorder %s55, %s69
      %p71 = scmp.eq.s32.totalorder %s24, 0
      %p72 = por %p70, %p71
      %s74 = sadd.s32 %s73, 1
      %p77 = scmp.eq.s32.totalorder %s18, 1
      %p78 = scmp.ne.s32.totalorder %s73, %s75
      %p79 = scmp.eq.s32.totalorder %s18, 0
      %p80 = por %p78, %p79
      %p81 = scmp.ne.s32.totalorder %s73, %s75
      %p82 = scmp.eq.s32.totalorder %s23, 1
      %p83 = por %p81, %p82
      %p84 = scmp.ne.s32.totalorder %s75, %s76
      %p85 = scmp.eq.s32.totalorder %s23, 0
      %p86 = por %p84, %p85
      %p87 = scmp.ne.s32.totalorder %s75, %s76
      %p88 = scmp.eq.s32.totalorder %s24, 1
      %p89 = por %p87, %p88
      %p91 = scmp.ne.s32.totalorder %s76, %s90
      %p92 = scmp.eq.s32.totalorder %s24, 0
      %p93 = por %p91, %p92
      %s95 = sadd.s32 %s94, 1
      %p98 = scmp.eq.s32.totalorder %s18, 1
      %p99 = scmp.ne.s32.totalorder %s94, %s96
      %p100 = scmp.eq.s32.totalorder %s18, 0
      %p101 = por %p99, %p100
      %p102 = scmp.ne.s32.totalorder %s94, %s96
      %p103 = scmp.eq.s32.totalorder %s23, 1
      %p104 = por %p102, %p103
      %p105 = scmp.ne.s32.totalorder %s96, %s97
      %p106 = scmp.eq.s32.totalorder %s23, 0
      %p107 = por %p105, %p106
      %p108 = scmp.ne.s32.totalorder %s96, %s97
      %p109 = scmp.eq.s32.totalorder %s24, 1
      %p110 = por %p108, %p109
      %p112 = scmp.ne.s32.totalorder %s97, %s111
      %p113 = scmp.eq.s32.totalorder %s24, 0
      %p114 = por %p112, %p113
      %s116 = sadd.s32 %s115, 1
      %p119 = scmp.eq.s32.totalorder %s18, 1
      %p120 = scmp.ne.s32.totalorder %s115, %s117
      %p121 = scmp.eq.s32.totalorder %s18, 0
      %p122 = por %p120, %p121
      %p123 = scmp.ne.s32.totalorder %s115, %s117
      %p124 = scmp.eq.s32.totalorder %s23, 1
      %p125 = por %p123, %p124
      %p126 = scmp.ne.s32.totalorder %s117, %s118
      %p127 = scmp.eq.s32.totalorder %s23, 0
      %p128 = por %p126, %p127
      %p129 = scmp.ne.s32.totalorder %s117, %s118
      %p130 = scmp.eq.s32.totalorder %s24, 1
      %p131 = por %p129, %p130
      %p133 = scmp.ne.s32.totalorder %s118, %s132
      %p134 = scmp.eq.s32.totalorder %s24, 0
      %p135 = por %p133, %p134
      %s137 = sadd.s32 %s136, 1
      %p140 = scmp.eq.s32.totalorder %s18, 1
      %p141 = scmp.ne.s32.totalorder %s136, %s138
      %p142 = scmp.eq.s32.totalorder %s18, 0
      %p143 = por %p141, %p142
      %p144 = scmp.ne.s32.totalorder %s136, %s138
      %p145 = scmp.eq.s32.totalorder %s23, 1
      %p146 = por %p144, %p145
      %p147 = scmp.ne.s32.totalorder %s138, %s139
      %p148 = scmp.eq.s32.totalorder %s23, 0
      %p149 = por %p147, %p148
      %p150 = scmp.ne.s32.totalorder %s138, %s139
      %p151 = scmp.eq.s32.totalorder %s24, 1
      %p152 = por %p150, %p151
      %p154 = scmp.ne.s32.totalorder %s139, %s153
      %p155 = scmp.eq.s32.totalorder %s24, 0
      %p156 = por %p154, %p155
      %s158 = sadd.s32 %s157, 1
      %p161 = scmp.eq.s32.totalorder %s18, 1
      %p162 = scmp.ne.s32.totalorder %s157, %s159
      %p163 = scmp.eq.s32.totalorder %s18, 0
      %p164 = por %p162, %p163
      %p165 = scmp.ne.s32.totalorder %s157, %s159
      %p166 = scmp.eq.s32.totalorder %s23, 1
      %p167 = por %p165, %p166
      %p168 = scmp.ne.s32.totalorder %s159, %s160
      %p169 = scmp.eq.s32.totalorder %s23, 0
      %p170 = por %p168, %p169
      %p171 = scmp.ne.s32.totalorder %s159, %s160
      %p172 = scmp.eq.s32.totalorder %s24, 1
      %p173 = por %p171, %p172
      %p175 = scmp.ne.s32.totalorder %s160, %s174
      %p176 = scmp.eq.s32.totalorder %s24, 0
      %p177 = por %p175, %p176
      %s178 = ssub.s32 %s18, %s25
      %p179 = scmp.eq.s32.totalorder %s178, 0
      %s181 = sadd.s32 %s180, 1
      %s182 = scalar_select %p179, %s180, %s181
      %p185 = pneg %p179
      %p186 = scmp.eq.s32.totalorder %s18, 1
      %p187 = por %p185, %p186
      %p188 = scmp.ne.s32.totalorder %s180, %s183
      %p189 = scmp.eq.s32.totalorder %s18, 0
      %p190 = por %p188, %p189
      %p191 = scmp.ne.s32.totalorder %s180, %s183
      %p192 = scmp.eq.s32.totalorder %s23, 1
      %p193 = por %p191, %p192
      %p194 = scmp.ne.s32.totalorder %s183, %s184
      %p195 = scmp.eq.s32.totalorder %s23, 0
      %p196 = por %p194, %p195
      %p197 = scmp.ne.s32.totalorder %s183, %s184
      %p198 = scmp.eq.s32.totalorder %s24, 1
      %p199 = por %p197, %p198
      %p201 = scmp.ne.s32.totalorder %s184, %s200
      %p202 = scmp.eq.s32.totalorder %s24, 0
      %p203 = por %p201, %p202
      %p204 = scmp.le.s32.totalorder 1, %s18
      %p205 = scmp.lt.s32.totalorder %s18, 3
      %p206 = pnand %p204, %p205
      %p207 = pneg %p206
      // Predicated region
      $region9: #{tpu_custom_call.1} parent=5 // pred_check
        _
      $region10: #{tpu_custom_call.1} parent=5 // pred_check_branch
        %209 = sbr.rel (%p206) target = $region12
      $region11: #{tpu_custom_call.1} parent=5 // pred_region
        %s210 = ssub.s32 %s18, 1
        // Predicated region
        $region13: #{tpu_custom_call.1} parent=11 // pred_check
          %p211 = pneg %p65
        $region14: #{tpu_custom_call.1} parent=11 // pred_check_branch
          %213 = sbr.rel (%p211) target = $region16
        $region15: #{tpu_custom_call.1} parent=11 // pred_region
          _
        $region16: #{tpu_custom_call.1} parent=11 // pred_fallthru
          _
        // Predicated region
        $region17: #{tpu_custom_call.1} parent=11 // pred_check
          %p214 = pneg %p86
        $region18: #{tpu_custom_call.1} parent=11 // pred_check_branch
          %216 = sbr.rel (%p214) target = $region20
        $region19: #{tpu_custom_call.1} parent=11 // pred_region
          _
        $region20: #{tpu_custom_call.1} parent=11 // pred_fallthru
          _
        // Predicated region
        $region21: #{tpu_custom_call.1} parent=11 // pred_check
          %p217 = pneg %p107
        $region22: #{tpu_custom_call.1} parent=11 // pred_check_branch
          %219 = sbr.rel (%p217) target = $region24
        $region23: #{tpu_custom_call.1} parent=11 // pred_region
          _
        $region24: #{tpu_custom_call.1} parent=11 // pred_fallthru
          _
        // Predicated region
        $region25: #{tpu_custom_call.1} parent=11 // pred_check
          %p220 = pneg %p128
        $region26: #{tpu_custom_call.1} parent=11 // pred_check_branch
          %222 = sbr.rel (%p220) target = $region28
        $region27: #{tpu_custom_call.1} parent=11 // pred_region
          _
        $region28: #{tpu_custom_call.1} parent=11 // pred_fallthru
          _
        // Predicated region
        $region29: #{tpu_custom_call.1} parent=11 // pred_check
          %p223 = pneg %p149
        $region30: #{tpu_custom_call.1} parent=11 // pred_check_branch
          %225 = sbr.rel (%p223) target = $region32
        $region31: #{tpu_custom_call.1} parent=11 // pred_region
          _
        $region32: #{tpu_custom_call.1} parent=11 // pred_fallthru
          _
        // Predicated region
        $region33: #{tpu_custom_call.1} parent=11 // pred_check
          %p226 = pneg %p170
        $region34: #{tpu_custom_call.1} parent=11 // pred_check_branch
          %228 = sbr.rel (%p226) target = $region36
        $region35: #{tpu_custom_call.1} parent=11 // pred_region
          _
        $region36: #{tpu_custom_call.1} parent=11 // pred_fallthru
          _
      $region12: #{tpu_custom_call.1} parent=5 // pred_fallthru
        _
      %p229 = scmp.lt.s32.totalorder %s18, 2
      // Predicated region
      $region37: #{tpu_custom_call.1} parent=5 // pred_check
        %p230 = pneg %p229
      $region38: #{tpu_custom_call.1} parent=5 // pred_check_branch
        %232 = sbr.rel (%p230) target = $region40
      $region39: #{tpu_custom_call.1} parent=5 // pred_region
        // Predicated region
        $region41: #{tpu_custom_call.1} parent=39 // pred_check
          %p233 = pneg %p38
        $region42: #{tpu_custom_call.1} parent=39 // pred_check_branch
          %235 = sbr.rel (%p233) target = $region44
        $region43: #{tpu_custom_call.1} parent=39 // pred_region
          %s236 = smul.u32 32, %s18
          %p237 = scmp.lt.s32.totalorder %s236, 63
          %s238 = scalar_select %p237, %s236, 63
          %s239 = smul.addr %s238, 4
          %s240 = scalar_lea.vmem %s0, %s239
          %s241 = smul.u32 32, %s18
        $region44: #{tpu_custom_call.1} parent=39 // pred_fallthru
          _
      $region40: #{tpu_custom_call.1} parent=5 // pred_fallthru
        _
      %p242 = scmp.le.s32.totalorder 1, %s18
      %p243 = scmp.lt.s32.totalorder %s18, 3
      %p244 = pnand %p242, %p243
      %p245 = pneg %p244
      // Predicated region
      $region45: #{tpu_custom_call.1} parent=5 // pred_check
        _
      $region46: #{tpu_custom_call.1} parent=5 // pred_check_branch
        %247 = sbr.rel (%p244) target = $region48
      $region47: #{tpu_custom_call.1} parent=5 // pred_region
        %s248 = ssub.s32 %s18, 1
        %s249 = smul.u32 32, %s23
        %p250 = scmp.lt.s32.totalorder %s249, 63
        %s251 = scalar_select %p250, %s249, 63
        %s252 = smul.addr %s251, 4
        %s253 = scalar_lea.vmem %s0, %s252
        %p254 = pneg %p44
        %p255 = pneg %p41
        %p256 = pneg %p65
        %p257 = pneg %p62
        %p258 = pneg %p86
        %p259 = pneg %p83
        %p260 = pneg %p107
        %p261 = pneg %p104
        %p262 = pneg %p128
        %p263 = pneg %p125
        %p264 = pneg %p149
        %p265 = pneg %p146
        %p266 = pneg %p170
        %p267 = pneg %p167
        %p268 = pneg %p196
        %p269 = pneg %p193
        %s270 = sand.u32 %s183, 1
        %s271 = scalar_lea.sflag [#allocation4], %s270
        %s272 = sand.u32 %s183, 1
        %s273 = smul.addr %s272, 2
        %s274 = scalar_lea.vmem [#allocation3], %s273
        %s275 = smul.u32 32, %s23
        %p276 = scmp.lt.s32.totalorder %s275, 63
        %s277 = scalar_select %p276, %s275, 63
        %s278 = smul.addr %s277, 4
        %s279 = scalar_lea.vmem %s0, %s278
        %s280 = smul.u32 32, %s23
        %s281 = smul.u32 2, %s23
        %v283 = vld [vmem:[%s279] sm:$0xf]
        %v284 = vld [vmem:[%s279 + $0x4] sm:$0xf]
        %v285 = vld [vmem:[%s279 + $0x8] sm:$0xf]
        %v286 = vld [vmem:[%s279 + $0xc] sm:$0xf]
        %v287 = vld [vmem:[%s279 + $0x10] sm:$0xf]
        %v288 = vld [vmem:[%s279 + $0x14] sm:$0xf]
        %v289 = vld [vmem:[%s279 + $0x18] sm:$0xf]
        %v290 = vld [vmem:[%s279 + $0x1c] sm:$0xf]
        %v291 = vld [vmem:[%s279 + $0x20] sm:$0xf]
        %v292 = vld [vmem:[%s279 + $0x24] sm:$0xf]
        %v293 = vld [vmem:[%s279 + $0x28] sm:$0xf]
        %v294 = vld [vmem:[%s279 + $0x2c] sm:$0xf]
        %v295 = vld [vmem:[%s279 + $0x30] sm:$0xf]
        %v296 = vld [vmem:[%s279 + $0x34] sm:$0xf]
        %v297 = vld [vmem:[%s279 + $0x38] sm:$0xf]
        %v298 = vld [vmem:[%s279 + $0x3c] sm:$0xf]
        %v299 = vld [vmem:[%s279 + $0x40] sm:$0xf]
        %v300 = vld [vmem:[%s279 + $0x44] sm:$0xf]
        %v301 = vld [vmem:[%s279 + $0x48] sm:$0xf]
        %v302 = vld [vmem:[%s279 + $0x4c] sm:$0xf]
        %v303 = vld [vmem:[%s279 + $0x50] sm:$0xf]
        %v304 = vld [vmem:[%s279 + $0x54] sm:$0xf]
        %v305 = vld [vmem:[%s279 + $0x58] sm:$0xf]
        %v306 = vld [vmem:[%s279 + $0x5c] sm:$0xf]
        %v307 = vld [vmem:[%s279 + $0x60] sm:$0xf]
        %v308 = vld [vmem:[%s279 + $0x64] sm:$0xf]
        %v309 = vld [vmem:[%s279 + $0x68] sm:$0xf]
        %v310 = vld [vmem:[%s279 + $0x6c] sm:$0xf]
        %v311 = vld [vmem:[%s279 + $0x70] sm:$0xf]
        %v312 = vld [vmem:[%s279 + $0x74] sm:$0xf]
        %v313 = vld [vmem:[%s279 + $0x78] sm:$0xf]
        %v314 = vld [vmem:[%s279 + $0x7c] sm:$0xf]
        %v315 = vld [vmem:[%s1] sm:$0xf]
        %v316 = vld [vmem:[%s1 + $0x4] sm:$0xf]
        %v317 = vld [vmem:[%s2] sm:$0x1]
        %v319 = vlaneseq
        %v320 = vshrl.u32 %v319, 7
        %v321 = vsub.s32 0, %v320
        %v322 = vrot.slane %v317, %v321
        %v356 = vunpack.c.l.b16 %v283
        %v357 = vunpack.c.l.b16 %v284
        %v358 = vunpack.c.l.b16 %v285
        %v359 = vunpack.c.l.b16 %v286
        %v360 = vunpack.c.l.b16 %v287
        %v361 = vunpack.c.l.b16 %v288
        %v362 = vunpack.c.l.b16 %v289
        %v363 = vunpack.c.l.b16 %v290
        %v364 = vunpack.c.l.b16 %v291
        %v365 = vunpack.c.l.b16 %v292
        %v366 = vunpack.c.l.b16 %v293
        %v367 = vunpack.c.l.b16 %v294
        %v368 = vunpack.c.l.b16 %v295
        %v369 = vunpack.c.l.b16 %v296
        %v370 = vunpack.c.l.b16 %v297
        %v371 = vunpack.c.l.b16 %v298
        %v372 = vunpack.c.l.b16 %v299
        %v373 = vunpack.c.l.b16 %v300
        %v374 = vunpack.c.l.b16 %v301
        %v375 = vunpack.c.l.b16 %v302
        %v376 = vunpack.c.l.b16 %v303
        %v377 = vunpack.c.l.b16 %v304
        %v378 = vunpack.c.l.b16 %v305
        %v379 = vunpack.c.l.b16 %v306
        %v380 = vunpack.c.l.b16 %v307
        %v381 = vunpack.c.l.b16 %v308
        %v382 = vunpack.c.l.b16 %v309
        %v383 = vunpack.c.l.b16 %v310
        %v384 = vunpack.c.l.b16 %v311
        %v385 = vunpack.c.l.b16 %v312
        %v386 = vunpack.c.l.b16 %v313
        %v387 = vunpack.c.l.b16 %v314
        %v388 = vpack.c.b16 %v357, %v356
        %v389 = vpack.c.b16 %v359, %v358
        %v390 = vpack.c.b16 %v361, %v360
        %v391 = vpack.c.b16 %v363, %v362
        %v392 = vpack.c.b16 %v365, %v364
        %v393 = vpack.c.b16 %v367, %v366
        %v394 = vpack.c.b16 %v369, %v368
        %v395 = vpack.c.b16 %v371, %v370
        %v396 = vpack.c.b16 %v373, %v372
        %v397 = vpack.c.b16 %v375, %v374
        %v398 = vpack.c.b16 %v377, %v376
        %v399 = vpack.c.b16 %v379, %v378
        %v400 = vpack.c.b16 %v381, %v380
        %v401 = vpack.c.b16 %v383, %v382
        %v402 = vpack.c.b16 %v385, %v384
        %v403 = vpack.c.b16 %v387, %v386
        %v406 = vunpack.c.l.b16 %v315
        %v407 = vunpack.c.l.b16 %v316
        %v408 = vpack.c.b16 %v407, %v406
        %vm410 = vcmask 130048
        %v412 = vsel %vm410, %v388, 0
        %v415 = vsel %vm410, %v389, 0
        %v418 = vsel %vm410, %v390, 0
        %v421 = vsel %vm410, %v391, 0
        %v424 = vsel %vm410, %v392, 0
        %v427 = vsel %vm410, %v393, 0
        %v430 = vsel %vm410, %v394, 0
        %v433 = vsel %vm410, %v395, 0
        %v436 = vsel %vm410, %v396, 0
        %v439 = vsel %vm410, %v397, 0
        %v442 = vsel %vm410, %v398, 0
        %v445 = vsel %vm410, %v399, 0
        %v448 = vsel %vm410, %v400, 0
        %v451 = vsel %vm410, %v401, 0
        %v454 = vsel %vm410, %v402, 0
        %v457 = vsel %vm410, %v403, 0
        %459 = vmatprep.subr.bf16.mxu0 0
        %460 = vmatpush1.bf16.msra.mxu0 %v408
        %461 = vmatprep.subr.bf16.mxu0 0
        %462 = vmatpush1.bf16.msra.mxu0 0
        %463 = vmatprep.subr.bf16.mxu0 0
        %464 = vmatpush1.bf16.msra.mxu0 0
        %465 = vmatprep.subr.bf16.mxu0 0
        %466 = vmatpush1.bf16.msra.mxu0 0
        %467 = vmatprep.subr.bf16.mxu0 0
        %468 = vmatpush1.bf16.msra.mxu0 0
        %469 = vmatprep.subr.bf16.mxu0 0
        %470 = vmatpush1.bf16.msra.mxu0 0
        %471 = vmatprep.subr.bf16.mxu0 0
        %472 = vmatpush1.bf16.msra.mxu0 0
        %473 = vmatprep.subr.bf16.mxu0 0
        %474 = vmatpush1.bf16.msra.mxu0 0
        %475 = vmatprep.subr.bf16.mxu0 0
        %476 = vmatpush1.bf16.msra.mxu0 0
        %477 = vmatprep.subr.bf16.mxu0 0
        %478 = vmatpush1.bf16.msra.mxu0 0
        %479 = vmatprep.subr.bf16.mxu0 0
        %480 = vmatpush1.bf16.msra.mxu0 0
        %481 = vmatprep.subr.bf16.mxu0 0
        %482 = vmatpush1.bf16.msra.mxu0 0
        %483 = vmatprep.subr.bf16.mxu0 0
        %484 = vmatpush1.bf16.msra.mxu0 0
        %485 = vmatprep.subr.bf16.mxu0 0
        %486 = vmatpush1.bf16.msra.mxu0 0
        %487 = vmatprep.subr.bf16.mxu0 0
        %488 = vmatpush1.bf16.msra.mxu0 0
        %489 = vmatprep.subr.bf16.mxu0 0
        %490 = vmatpush1.bf16.msra.mxu0 0
        %491 = vmatprep.mubr.bf16.mxu0 0
        %492 = vmatmul.mubr.bf16.gmra.mrb[0].mxu0 %v412
        %v493 = vpop.f32.mrb[0].mxu0
        %v494 = vadd.f32 %v322, %v493
        %v495 = vpop.f32.mrb[0].mxu0
        %v496 = vpop.f32.mrb[0].mxu0
        %v497 = vadd.f32 %v322, %v496
        %v498 = vpop.f32.mrb[0].mxu0
        %499 = vmatprep.mubr.bf16.mxu0 0
        %500 = vmatmul.mubr.bf16.gmra.mrb[0].mxu0 %v415
        %v501 = vpop.f32.mrb[0].mxu0
        %v502 = vadd.f32 %v322, %v501
        %v503 = vpop.f32.mrb[0].mxu0
        %v504 = vpop.f32.mrb[0].mxu0
        %v505 = vadd.f32 %v322, %v504
        %v506 = vpop.f32.mrb[0].mxu0
        %507 = vmatprep.mubr.bf16.mxu0 0
        %508 = vmatmul.mubr.bf16.gmra.mrb[0].mxu0 %v418
        %v509 = vpop.f32.mrb[0].mxu0
        %v510 = vadd.f32 %v322, %v509
        %v511 = vpop.f32.mrb[0].mxu0
        %v512 = vpop.f32.mrb[0].mxu0
        %v513 = vadd.f32 %v322, %v512
        %v514 = vpop.f32.mrb[0].mxu0
        %515 = vmatprep.mubr.bf16.mxu0 0
        %516 = vmatmul.mubr.bf16.gmra.mrb[0].mxu0 %v421
        %v517 = vpop.f32.mrb[0].mxu0
        %v518 = vadd.f32 %v322, %v517
        %v519 = vpop.f32.mrb[0].mxu0
        %v520 = vpop.f32.mrb[0].mxu0
        %v521 = vadd.f32 %v322, %v520
        %v522 = vpop.f32.mrb[0].mxu0
        %523 = vmatprep.mubr.bf16.mxu0 0
        %524 = vmatmul.mubr.bf16.gmra.mrb[0].mxu0 %v424
        %v525 = vpop.f32.mrb[0].mxu0
        %v526 = vadd.f32 %v322, %v525
        %v527 = vpop.f32.mrb[0].mxu0
        %v528 = vpop.f32.mrb[0].mxu0
        %v529 = vadd.f32 %v322, %v528
        %v530 = vpop.f32.mrb[0].mxu0
        %531 = vmatprep.mubr.bf16.mxu0 0
        %532 = vmatmul.mubr.bf16.gmra.mrb[0].mxu0 %v427
        %v533 = vpop.f32.mrb[0].mxu0
        %v534 = vadd.f32 %v322, %v533
        %v535 = vpop.f32.mrb[0].mxu0
        %v536 = vpop.f32.mrb[0].mxu0
        %v537 = vadd.f32 %v322, %v536
        %v538 = vpop.f32.mrb[0].mxu0
        %539 = vmatprep.mubr.bf16.mxu0 0
        %540 = vmatmul.mubr.bf16.gmra.mrb[0].mxu0 %v430
        %v541 = vpop.f32.mrb[0].mxu0
        %v542 = vadd.f32 %v322, %v541
        %v543 = vpop.f32.mrb[0].mxu0
        %v544 = vpop.f32.mrb[0].mxu0
        %v545 = vadd.f32 %v322, %v544
        %v546 = vpop.f32.mrb[0].mxu0
        %547 = vmatprep.mubr.bf16.mxu0 0
        %548 = vmatmul.mubr.bf16.gmra.mrb[0].mxu0 %v433
        %v549 = vpop.f32.mrb[0].mxu0
        %v550 = vadd.f32 %v322, %v549
        %v551 = vpop.f32.mrb[0].mxu0
        %v552 = vpop.f32.mrb[0].mxu0
        %v553 = vadd.f32 %v322, %v552
        %v554 = vpop.f32.mrb[0].mxu0
        %555 = vmatprep.mubr.bf16.mxu0 0
        %556 = vmatmul.mubr.bf16.gmra.mrb[0].mxu0 %v436
        %v557 = vpop.f32.mrb[0].mxu0
        %v558 = vadd.f32 %v322, %v557
        %v559 = vpop.f32.mrb[0].mxu0
        %v560 = vpop.f32.mrb[0].mxu0
        %v561 = vadd.f32 %v322, %v560
        %v562 = vpop.f32.mrb[0].mxu0
        %563 = vmatprep.mubr.bf16.mxu0 0
        %564 = vmatmul.mubr.bf16.gmra.mrb[0].mxu0 %v439
        %v565 = vpop.f32.mrb[0].mxu0
        %v566 = vadd.f32 %v322, %v565
        %v567 = vpop.f32.mrb[0].mxu0
        %v568 = vpop.f32.mrb[0].mxu0
        %v569 = vadd.f32 %v322, %v568
        %v570 = vpop.f32.mrb[0].mxu0
        %571 = vmatprep.mubr.bf16.mxu0 0
        %572 = vmatmul.mubr.bf16.gmra.mrb[0].mxu0 %v442
        %v573 = vpop.f32.mrb[0].mxu0
        %v574 = vadd.f32 %v322, %v573
        %v575 = vpop.f32.mrb[0].mxu0
        %v576 = vpop.f32.mrb[0].mxu0
        %v577 = vadd.f32 %v322, %v576
        %v578 = vpop.f32.mrb[0].mxu0
        %579 = vmatprep.mubr.bf16.mxu0 0
        %580 = vmatmul.mubr.bf16.gmra.mrb[0].mxu0 %v445
        %v581 = vpop.f32.mrb[0].mxu0
        %v582 = vadd.f32 %v322, %v581
        %v583 = vpop.f32.mrb[0].mxu0
        %v584 = vpop.f32.mrb[0].mxu0
        %v585 = vadd.f32 %v322, %v584
        %v586 = vpop.f32.mrb[0].mxu0
        %587 = vmatprep.mubr.bf16.mxu0 0
        %588 = vmatmul.mubr.bf16.gmra.mrb[0].mxu0 %v448
        %v589 = vpop.f32.mrb[0].mxu0
        %v590 = vadd.f32 %v322, %v589
        %v591 = vpop.f32.mrb[0].mxu0
        %v592 = vpop.f32.mrb[0].mxu0
        %v593 = vadd.f32 %v322, %v592
        %v594 = vpop.f32.mrb[0].mxu0
        %595 = vmatprep.mubr.bf16.mxu0 0
        %596 = vmatmul.mubr.bf16.gmra.mrb[0].mxu0 %v451
        %v597 = vpop.f32.mrb[0].mxu0
        %v598 = vadd.f32 %v322, %v597
        %v599 = vpop.f32.mrb[0].mxu0
        %v600 = vpop.f32.mrb[0].mxu0
        %v601 = vadd.f32 %v322, %v600
        %v602 = vpop.f32.mrb[0].mxu0
        %603 = vmatprep.mubr.bf16.mxu0 0
        %604 = vmatmul.mubr.bf16.gmra.mrb[0].mxu0 %v454
        %v605 = vpop.f32.mrb[0].mxu0
        %v606 = vadd.f32 %v322, %v605
        %v607 = vpop.f32.mrb[0].mxu0
        %v608 = vpop.f32.mrb[0].mxu0
        %v609 = vadd.f32 %v322, %v608
        %v610 = vpop.f32.mrb[0].mxu0
        %611 = vmatprep.mubr.bf16.mxu0 0
        %612 = vmatmul.mubr.bf16.gmra.mrb[0].mxu0 %v457
        %v613 = vpop.f32.mrb[0].mxu0
        %v614 = vadd.f32 %v322, %v613
        %v615 = vpop.f32.mrb[0].mxu0
        %v616 = vpop.f32.mrb[0].mxu0
        %v617 = vadd.f32 %v322, %v616
        %v618 = vpop.f32.mrb[0].mxu0
        %619 = vdwg.mxu0
        %v620 = vmax.f32 %v494, 0.0
        %v621 = vmax.f32 %v497, 0.0
        %v622 = vmax.f32 %v502, 0.0
        %v623 = vmax.f32 %v505, 0.0
        %v624 = vmax.f32 %v510, 0.0
        %v625 = vmax.f32 %v513, 0.0
        %v626 = vmax.f32 %v518, 0.0
        %v627 = vmax.f32 %v521, 0.0
        %v628 = vmax.f32 %v526, 0.0
        %v629 = vmax.f32 %v529, 0.0
        %v630 = vmax.f32 %v534, 0.0
        %v631 = vmax.f32 %v537, 0.0
        %v632 = vmax.f32 %v542, 0.0
        %v633 = vmax.f32 %v545, 0.0
        %v634 = vmax.f32 %v550, 0.0
        %v635 = vmax.f32 %v553, 0.0
        %v636 = vmax.f32 %v558, 0.0
        %v637 = vmax.f32 %v561, 0.0
        %v638 = vmax.f32 %v566, 0.0
        %v639 = vmax.f32 %v569, 0.0
        %v640 = vmax.f32 %v574, 0.0
        %v641 = vmax.f32 %v577, 0.0
        %v642 = vmax.f32 %v582, 0.0
        %v643 = vmax.f32 %v585, 0.0
        %v644 = vmax.f32 %v590, 0.0
        %v645 = vmax.f32 %v593, 0.0
        %v646 = vmax.f32 %v598, 0.0
        %v647 = vmax.f32 %v601, 0.0
        %v648 = vmax.f32 %v606, 0.0
        %v649 = vmax.f32 %v609, 0.0
        %v650 = vmax.f32 %v614, 0.0
        %v651 = vmax.f32 %v617, 0.0
        %v652 = vpack.c.bf16 %v621, %v620
        %v653 = vpack.c.bf16 %v623, %v622
        %v654 = vpack.c.bf16 %v625, %v624
        %v655 = vpack.c.bf16 %v627, %v626
        %v656 = vpack.c.bf16 %v629, %v628
        %v657 = vpack.c.bf16 %v631, %v630
        %v658 = vpack.c.bf16 %v633, %v632
        %v659 = vpack.c.bf16 %v635, %v634
        %v660 = vpack.c.bf16 %v637, %v636
        %v661 = vpack.c.bf16 %v639, %v638
        %v662 = vpack.c.bf16 %v641, %v640
        %v663 = vpack.c.bf16 %v643, %v642
        %v664 = vpack.c.bf16 %v645, %v644
        %v665 = vpack.c.bf16 %v647, %v646
        %v666 = vpack.c.bf16 %v649, %v648
        %v667 = vpack.c.bf16 %v651, %v650
        %v668 = vld [vmem:[%s3] sm:$0xf]
        %v669 = vld [vmem:[%s3 + $0x4] sm:$0xf]
        %v670 = vld [vmem:[%s3 + $0x8] sm:$0xf]
        %v671 = vld [vmem:[%s3 + $0xc] sm:$0xf]
        %v672 = vld [vmem:[%s3 + $0x10] sm:$0xf]
        %v673 = vld [vmem:[%s3 + $0x14] sm:$0xf]
        %v674 = vld [vmem:[%s3 + $0x18] sm:$0xf]
        %v675 = vld [vmem:[%s3 + $0x1c] sm:$0xf]
        %v676 = vld [vmem:[%s3 + $0x20] sm:$0xf]
        %v677 = vld [vmem:[%s3 + $0x24] sm:$0xf]
        %v678 = vld [vmem:[%s3 + $0x28] sm:$0xf]
        %v679 = vld [vmem:[%s3 + $0x2c] sm:$0xf]
        %v680 = vld [vmem:[%s3 + $0x30] sm:$0xf]
        %v681 = vld [vmem:[%s3 + $0x34] sm:$0xf]
        %v682 = vld [vmem:[%s3 + $0x38] sm:$0xf]
        %v683 = vld [vmem:[%s3 + $0x3c] sm:$0xf]
        %v684 = vld [vmem:[%s4] sm:$0x1]
        %v686 = vlaneseq
        %v687 = vshrl.u32 %v686, 7
        %v688 = vsub.s32 0, %v687
        %v689 = vrot.slane %v684, %v688
        %v707 = vunpack.c.l.b16 %v668
        %v708 = vunpack.c.l.b16 %v669
        %v709 = vunpack.c.l.b16 %v670
        %v710 = vunpack.c.l.b16 %v671
        %v711 = vunpack.c.l.b16 %v672
        %v712 = vunpack.c.l.b16 %v673
        %v713 = vunpack.c.l.b16 %v674
        %v714 = vunpack.c.l.b16 %v675
        %v715 = vunpack.c.l.b16 %v676
        %v716 = vunpack.c.l.b16 %v677
        %v717 = vunpack.c.l.b16 %v678
        %v718 = vunpack.c.l.b16 %v679
        %v719 = vunpack.c.l.b16 %v680
        %v720 = vunpack.c.l.b16 %v681
        %v721 = vunpack.c.l.b16 %v682
        %v722 = vunpack.c.l.b16 %v683
        %v723 = vpack.c.b16 %v708, %v707
        %v724 = vpack.c.b16 %v710, %v709
        %v725 = vpack.c.b16 %v712, %v711
        %v726 = vpack.c.b16 %v714, %v713
        %v727 = vpack.c.b16 %v716, %v715
        %v728 = vpack.c.b16 %v718, %v717
        %v729 = vpack.c.b16 %v720, %v719
        %v730 = vpack.c.b16 %v722, %v721
        %739 = vmatprep.subr.bf16.mxu0 0
        %740 = vmatpush1.bf16.msra.mxu0 %v723
        %741 = vmatprep.subr.bf16.mxu0 0
        %742 = vmatpush1.bf16.msra.mxu0 %v724
        %743 = vmatprep.subr.bf16.mxu0 0
        %744 = vmatpush1.bf16.msra.mxu0 %v725
        %745 = vmatprep.subr.bf16.mxu0 0
        %746 = vmatpush1.bf16.msra.mxu0 %v726
        %747 = vmatprep.subr.bf16.mxu0 0
        %748 = vmatpush1.bf16.msra.mxu0 %v727
        %749 = vmatprep.subr.bf16.mxu0 0
        %750 = vmatpush1.bf16.msra.mxu0 %v728
        %751 = vmatprep.subr.bf16.mxu0 0
        %752 = vmatpush1.bf16.msra.mxu0 %v729
        %753 = vmatprep.subr.bf16.mxu0 0
        %754 = vmatpush1.bf16.msra.mxu0 %v730
        %755 = vmatprep.subr.bf16.mxu0 0
        %756 = vmatpush1.bf16.msra.mxu0 0
        %757 = vmatprep.subr.bf16.mxu0 0
        %758 = vmatpush1.bf16.msra.mxu0 0
        %759 = vmatprep.subr.bf16.mxu0 0
        %760 = vmatpush1.bf16.msra.mxu0 0
        %761 = vmatprep.subr.bf16.mxu0 0
        %762 = vmatpush1.bf16.msra.mxu0 0
        %763 = vmatprep.subr.bf16.mxu0 0
        %764 = vmatpush1.bf16.msra.mxu0 0
        %765 = vmatprep.subr.bf16.mxu0 0
        %766 = vmatpush1.bf16.msra.mxu0 0
        %767 = vmatprep.subr.bf16.mxu0 0
        %768 = vmatpush1.bf16.msra.mxu0 0
        %769 = vmatprep.subr.bf16.mxu0 0
        %770 = vmatpush1.bf16.msra.mxu0 0
        %771 = vmatprep.mubr.bf16.mxu0 0
        %772 = vmatmul.mubr.bf16.gmra.mrb[0].mxu0 %v652
        %v773 = vpop.f32.mrb[0].mxu0
        %v774 = vadd.f32 %v689, %v773
        %v775 = vpop.f32.mrb[0].mxu0
        %v776 = vpop.f32.mrb[0].mxu0
        %v777 = vadd.f32 %v689, %v776
        %v778 = vpop.f32.mrb[0].mxu0
        %779 = vmatprep.mubr.bf16.mxu0 0
        %780 = vmatmul.mubr.bf16.gmra.mrb[0].mxu0 %v653
        %v781 = vpop.f32.mrb[0].mxu0
        %v782 = vadd.f32 %v689, %v781
        %v783 = vpop.f32.mrb[0].mxu0
        %v784 = vpop.f32.mrb[0].mxu0
        %v785 = vadd.f32 %v689, %v784
        %v786 = vpop.f32.mrb[0].mxu0
        %787 = vmatprep.mubr.bf16.mxu0 0
        %788 = vmatmul.mubr.bf16.gmra.mrb[0].mxu0 %v654
        %v789 = vpop.f32.mrb[0].mxu0
        %v790 = vadd.f32 %v689, %v789
        %v791 = vpop.f32.mrb[0].mxu0
        %v792 = vpop.f32.mrb[0].mxu0
        %v793 = vadd.f32 %v689, %v792
        %v794 = vpop.f32.mrb[0].mxu0
        %795 = vmatprep.mubr.bf16.mxu0 0
        %796 = vmatmul.mubr.bf16.gmra.mrb[0].mxu0 %v655
        %v797 = vpop.f32.mrb[0].mxu0
        %v798 = vadd.f32 %v689, %v797
        %v799 = vpop.f32.mrb[0].mxu0
        %v800 = vpop.f32.mrb[0].mxu0
        %v801 = vadd.f32 %v689, %v800
        %v802 = vpop.f32.mrb[0].mxu0
        %803 = vmatprep.mubr.bf16.mxu0 0
        %804 = vmatmul.mubr.bf16.gmra.mrb[0].mxu0 %v656
        %v805 = vpop.f32.mrb[0].mxu0
        %v806 = vadd.f32 %v689, %v805
        %v807 = vpop.f32.mrb[0].mxu0
        %v808 = vpop.f32.mrb[0].mxu0
        %v809 = vadd.f32 %v689, %v808
        %v810 = vpop.f32.mrb[0].mxu0
        %811 = vmatprep.mubr.bf16.mxu0 0
        %812 = vmatmul.mubr.bf16.gmra.mrb[0].mxu0 %v657
        %v813 = vpop.f32.mrb[0].mxu0
        %v814 = vadd.f32 %v689, %v813
        %v815 = vpop.f32.mrb[0].mxu0
        %v816 = vpop.f32.mrb[0].mxu0
        %v817 = vadd.f32 %v689, %v816
        %v818 = vpop.f32.mrb[0].mxu0
        %819 = vmatprep.mubr.bf16.mxu0 0
        %820 = vmatmul.mubr.bf16.gmra.mrb[0].mxu0 %v658
        %v821 = vpop.f32.mrb[0].mxu0
        %v822 = vadd.f32 %v689, %v821
        %v823 = vpop.f32.mrb[0].mxu0
        %v824 = vpop.f32.mrb[0].mxu0
        %v825 = vadd.f32 %v689, %v824
        %v826 = vpop.f32.mrb[0].mxu0
        %827 = vmatprep.mubr.bf16.mxu0 0
        %828 = vmatmul.mubr.bf16.gmra.mrb[0].mxu0 %v659
        %v829 = vpop.f32.mrb[0].mxu0
        %v830 = vadd.f32 %v689, %v829
        %v831 = vpop.f32.mrb[0].mxu0
        %v832 = vpop.f32.mrb[0].mxu0
        %v833 = vadd.f32 %v689, %v832
        %v834 = vpop.f32.mrb[0].mxu0
        %835 = vmatprep.mubr.bf16.mxu0 0
        %836 = vmatmul.mubr.bf16.gmra.mrb[0].mxu0 %v660
        %v837 = vpop.f32.mrb[0].mxu0
        %v838 = vadd.f32 %v689, %v837
        %v839 = vpop.f32.mrb[0].mxu0
        %v840 = vpop.f32.mrb[0].mxu0
        %v841 = vadd.f32 %v689, %v840
        %v842 = vpop.f32.mrb[0].mxu0
        %843 = vmatprep.mubr.bf16.mxu0 0
        %844 = vmatmul.mubr.bf16.gmra.mrb[0].mxu0 %v661
        %v845 = vpop.f32.mrb[0].mxu0
        %v846 = vadd.f32 %v689, %v845
        %v847 = vpop.f32.mrb[0].mxu0
        %v848 = vpop.f32.mrb[0].mxu0
        %v849 = vadd.f32 %v689, %v848
        %v850 = vpop.f32.mrb[0].mxu0
        %851 = vmatprep.mubr.bf16.mxu0 0
        %852 = vmatmul.mubr.bf16.gmra.mrb[0].mxu0 %v662
        %v853 = vpop.f32.mrb[0].mxu0
        %v854 = vadd.f32 %v689, %v853
        %v855 = vpop.f32.mrb[0].mxu0
        %v856 = vpop.f32.mrb[0].mxu0
        %v857 = vadd.f32 %v689, %v856
        %v858 = vpop.f32.mrb[0].mxu0
        %859 = vmatprep.mubr.bf16.mxu0 0
        %860 = vmatmul.mubr.bf16.gmra.mrb[0].mxu0 %v663
        %v861 = vpop.f32.mrb[0].mxu0
        %v862 = vadd.f32 %v689, %v861
        %v863 = vpop.f32.mrb[0].mxu0
        %v864 = vpop.f32.mrb[0].mxu0
        %v865 = vadd.f32 %v689, %v864
        %v866 = vpop.f32.mrb[0].mxu0
        %867 = vmatprep.mubr.bf16.mxu0 0
        %868 = vmatmul.mubr.bf16.gmra.mrb[0].mxu0 %v664
        %v869 = vpop.f32.mrb[0].mxu0
        %v870 = vadd.f32 %v689, %v869
        %v871 = vpop.f32.mrb[0].mxu0
        %v872 = vpop.f32.mrb[0].mxu0
        %v873 = vadd.f32 %v689, %v872
        %v874 = vpop.f32.mrb[0].mxu0
        %875 = vmatprep.mubr.bf16.mxu0 0
        %876 = vmatmul.mubr.bf16.gmra.mrb[0].mxu0 %v665
        %v877 = vpop.f32.mrb[0].mxu0
        %v878 = vadd.f32 %v689, %v877
        %v879 = vpop.f32.mrb[0].mxu0
        %v880 = vpop.f32.mrb[0].mxu0
        %v881 = vadd.f32 %v689, %v880
        %v882 = vpop.f32.mrb[0].mxu0
        %883 = vmatprep.mubr.bf16.mxu0 0
        %884 = vmatmul.mubr.bf16.gmra.mrb[0].mxu0 %v666
        %v885 = vpop.f32.mrb[0].mxu0
        %v886 = vadd.f32 %v689, %v885
        %v887 = vpop.f32.mrb[0].mxu0
        %v888 = vpop.f32.mrb[0].mxu0
        %v889 = vadd.f32 %v689, %v888
        %v890 = vpop.f32.mrb[0].mxu0
        %891 = vmatprep.mubr.bf16.mxu0 0
        %892 = vmatmul.mubr.bf16.gmra.mrb[0].mxu0 %v667
        %v893 = vpop.f32.mrb[0].mxu0
        %v894 = vadd.f32 %v689, %v893
        %v895 = vpop.f32.mrb[0].mxu0
        %v896 = vpop.f32.mrb[0].mxu0
        %v897 = vadd.f32 %v689, %v896
        %v898 = vpop.f32.mrb[0].mxu0
        %899 = vdwg.mxu0
        %v900 = vmax.f32 %v774, 0.0
        %v901 = vmax.f32 %v777, 0.0
        %v902 = vmax.f32 %v782, 0.0
        %v903 = vmax.f32 %v785, 0.0
        %v904 = vmax.f32 %v790, 0.0
        %v905 = vmax.f32 %v793, 0.0
        %v906 = vmax.f32 %v798, 0.0
        %v907 = vmax.f32 %v801, 0.0
        %v908 = vmax.f32 %v806, 0.0
        %v909 = vmax.f32 %v809, 0.0
        %v910 = vmax.f32 %v814, 0.0
        %v911 = vmax.f32 %v817, 0.0
        %v912 = vmax.f32 %v822, 0.0
        %v913 = vmax.f32 %v825, 0.0
        %v914 = vmax.f32 %v830, 0.0
        %v915 = vmax.f32 %v833, 0.0
        %v916 = vmax.f32 %v838, 0.0
        %v917 = vmax.f32 %v841, 0.0
        %v918 = vmax.f32 %v846, 0.0
        %v919 = vmax.f32 %v849, 0.0
        %v920 = vmax.f32 %v854, 0.0
        %v921 = vmax.f32 %v857, 0.0
        %v922 = vmax.f32 %v862, 0.0
        %v923 = vmax.f32 %v865, 0.0
        %v924 = vmax.f32 %v870, 0.0
        %v925 = vmax.f32 %v873, 0.0
        %v926 = vmax.f32 %v878, 0.0
        %v927 = vmax.f32 %v881, 0.0
        %v928 = vmax.f32 %v886, 0.0
        %v929 = vmax.f32 %v889, 0.0
        %v930 = vmax.f32 %v894, 0.0
        %v931 = vmax.f32 %v897, 0.0
        %v932 = vld [vmem:[%s5] sm:$0x1]
        %v933 = vpack.c.bf16 %v901, %v900
        %v934 = vpack.c.bf16 %v903, %v902
        %v935 = vpack.c.bf16 %v905, %v904
        %v936 = vpack.c.bf16 %v907, %v906
        %v937 = vpack.c.bf16 %v909, %v908
        %v938 = vpack.c.bf16 %v911, %v910
        %v939 = vpack.c.bf16 %v913, %v912
        %v940 = vpack.c.bf16 %v915, %v914
        %v941 = vpack.c.bf16 %v917, %v916
        %v942 = vpack.c.bf16 %v919, %v918
        %v943 = vpack.c.bf16 %v921, %v920
        %v944 = vpack.c.bf16 %v923, %v922
        %v945 = vpack.c.bf16 %v925, %v924
        %v946 = vpack.c.bf16 %v927, %v926
        %v947 = vpack.c.bf16 %v929, %v928
        %v948 = vpack.c.bf16 %v931, %v930
        %v949 = vld [vmem:[#allocation2] sm:$0x1]
        %951 = vset.pattern.permute.xlu0 0
        %952 = vperm.xlu0 %951, %v949
        %v953 = vpop.permute.xlu0 %952
        %v955 = vlaneseq
        %v956 = vshrl.u32 %v955, 7
        %v957 = vsub.s32 0, %v956
        %v958 = vrot.slane %v953, %v957
        %959 = vmatprep.subr.bf16.mxu0 0
        %960 = vmatpush1.bf16.xpose.msra.mxu0 %v933
        %961 = vmatprep.subr.bf16.mxu0 0
        %962 = vmatpush1.bf16.xpose.msra.mxu0 %v934
        %963 = vmatprep.subr.bf16.mxu0 0
        %964 = vmatpush1.bf16.xpose.msra.mxu0 %v935
        %965 = vmatprep.subr.bf16.mxu0 0
        %966 = vmatpush1.bf16.xpose.msra.mxu0 %v936
        %967 = vmatprep.subr.bf16.mxu0 0
        %968 = vmatpush1.bf16.xpose.msra.mxu0 %v937
        %969 = vmatprep.subr.bf16.mxu0 0
        %970 = vmatpush1.bf16.xpose.msra.mxu0 %v938
        %971 = vmatprep.subr.bf16.mxu0 0
        %972 = vmatpush1.bf16.xpose.msra.mxu0 %v939
        %973 = vmatprep.subr.bf16.mxu0 0
        %974 = vmatpush1.bf16.xpose.msra.mxu0 %v940
        %975 = vmatprep.subr.bf16.mxu0 0
        %976 = vmatpush1.bf16.xpose.msra.mxu0 %v941
        %977 = vmatprep.subr.bf16.mxu0 0
        %978 = vmatpush1.bf16.xpose.msra.mxu0 %v942
        %979 = vmatprep.subr.bf16.mxu0 0
        %980 = vmatpush1.bf16.xpose.msra.mxu0 %v943
        %981 = vmatprep.subr.bf16.mxu0 0
        %982 = vmatpush1.bf16.xpose.msra.mxu0 %v944
        %983 = vmatprep.subr.bf16.mxu0 0
        %984 = vmatpush1.bf16.xpose.msra.mxu0 %v945
        %985 = vmatprep.subr.bf16.mxu0 0
        %986 = vmatpush1.bf16.xpose.msra.mxu0 %v946
        %987 = vmatprep.subr.bf16.mxu0 0
        %988 = vmatpush1.bf16.xpose.msra.mxu0 %v947
        %989 = vmatprep.subr.bf16.mxu0 0
        %990 = vmatpush1.bf16.xpose.msra.mxu0 %v948
        %991 = vmatprep.mubr.bf16.mxu0 0
        %992 = vmatmul.mubr.bf16.gmra.mrb[0].mxu0 %v932
        %v993 = vpop.f32.mrb[0].mxu0
        %v994 = vadd.f32 %v958, %v993
        %v995 = vpop.f32.mrb[0].mxu0
        %v996 = vadd.f32 %v958, %v995
        %v997 = vpop.f32.mrb[0].mxu0
        %v998 = vpop.f32.mrb[0].mxu0
        %999 = vdwg.mxu0
        %v1002 = vcombine.low %v994, %v996
        %v1004 = vunpack.c.l.s4 1966171168
        %v1005 = vunpack.c.0.s8 %v1004
        %v1006 = vlaneseq
        %v1007 = vshrl.u32 %v1006, 7
        %v1008 = vsub.s32 %v1005, %v1007
        %v1009 = vrot.slane %v1002, %v1008
        %v1011 = vunpack.c.l.s4 1966171168
        %v1012 = vunpack.c.0.s8 %v1011
        %v1013 = vlaneseq
        %v1014 = vshrl.u32 %v1013, 7
        %v1015 = vsub.s32 %v1012, %v1014
        %v1016 = vrot.slane %v1009, %v1015
        %v1018 = vlaneseq
        %vm1019 = vcmp.ge.s32.totalorder %v1018, 0
        %vm1020 = vcmp.lt.s32.totalorder %v1018, 256
        %vm1021 = vmand %vm1019, %vm1020
        %1022 = vst.msk [vmem:[%s274] sm:$0x3] %vm1021, %v1016
        %s1023 = sand.u32 %s183, 1
        %s1024 = scalar_lea.sflag [#allocation4], %s1023
        %s1025 = sand.u32 %s183, 1
        %s1026 = smul.addr %s1025, 2
        %s1027 = scalar_lea.vmem [#allocation3], %s1026
        // Predicated region
        $region49: #{tpu_custom_call.1} parent=47 // pred_check
          %p1028 = pneg %p193
        $region50: #{tpu_custom_call.1} parent=47 // pred_check_branch
          %1030 = sbr.rel (%p1028) target = $region52
        $region51: #{tpu_custom_call.1} parent=47 // pred_region
          %s1031 = smul.u32 2, %s23
          %s1033 = ssub.s32 32, 32
          %1034 = vsyncadd %s1024, %s1033
          %s1035 = smul.addr %s1031, 16
          %s1036 = scalar_lea.hbm %s7, %s1035
          %s1038 = sshll.u32 %s1027, 4
          %s1039 = int_to_ptr.vmem [resolvable:$true] %s1038
          %1041 = dma.vmem_to_hbm [thread:$0]  %s1039, 32, %s1036, %s1024
        $region52: #{tpu_custom_call.1} parent=47 // pred_fallthru
          _
      $region48: #{tpu_custom_call.1} parent=5 // pred_fallthru
        _
      %p1042 = scmp.le.s32.totalorder 2, %s18
      // Predicated region
      $region53: #{tpu_custom_call.1} parent=5 // pred_check
        %p1043 = pneg %p1042
      $region54: #{tpu_custom_call.1} parent=5 // pred_check_branch
        %1045 = sbr.rel (%p1043) target = $region56
      $region55: #{tpu_custom_call.1} parent=5 // pred_region
        %s1046 = ssub.s32 %s18, 2
        // Predicated region
        $region57: #{tpu_custom_call.1} parent=55 // pred_check
          %p1047 = pneg %p199
        $region58: #{tpu_custom_call.1} parent=55 // pred_check_branch
          %1049 = sbr.rel (%p1047) target = $region60
        $region59: #{tpu_custom_call.1} parent=55 // pred_region
          %s1050 = sand.u32 %s184, 1
          %s1051 = scalar_lea.sflag [#allocation4], %s1050
          %s1052 = sand.u32 %s184, 1
          %s1053 = smul.addr %s1052, 2
          %s1054 = scalar_lea.vmem [#allocation3], %s1053
          %1055 = dma.done %s1051, 32
        $region60: #{tpu_custom_call.1} parent=55 // pred_fallthru
          _
      $region56: #{tpu_custom_call.1} parent=5 // pred_fallthru
        _
    $region6: #{tpu_custom_call.1} parent=1 // loop_footer
      %s22 = sadd.s32 1, %s18
    $region7: #{tpu_custom_call.1} parent=1 // loop_footer_branch
      %17 = sbr.rel target = $region3
    $region8: #{tpu_custom_call.1} parent=1 // loop_exit
      _
    %1056 = vsyncpa [#allocation4], 1
    %s1057 = scalar_lea.sflag [#allocation4], 1
    %1058 = vsyncpa %s1057, 1

</llo_original>
